<compile_context>
chip_gen: v5e
topology: v5e:2x2
jax: 0.10.0
libtpu: 0.0.40
codegen_flags: <defaults>
</compile_context>

<pallas_src>
import jax
import jax.numpy as jnp
from jax.experimental import pallas as pl
from jax.experimental.pallas import tpu as pltpu

# ---------------------------------------------------------------------------
# Problem sizes (small, consistent with the module's __init__)
# ---------------------------------------------------------------------------
B = 2           # batch size
T = 4           # spiking time window (len(logits))
S_IN = 16       # raw state feature size (preprocess input)
D = 32          # preprocess_net output dim == input_dim == embedding_dim
C = 64          # num_cosines (pop-encoding input size)
NF = 8          # num_fractions (== sample_size N)
FUSION = 512    # MCQuantiles fusion_size (default)
H = 32          # hidden_size = np.prod(hidden_sizes)
A = 4           # action dim (last_size)
BN = B * NF     # 16
TBN = T * BN    # 64

THR = 0.5       # LIF threshold
DECAY = 0.5     # LIF decay
R_MAX = 0.5
SIGMA = 0.05

F32 = jnp.float32
BF16 = jnp.bfloat16


# ---------------------------------------------------------------------------
# Fused Pallas kernel: pop-encoding Linear+LIF, MCQuantiles basal/apical +
# three-compartment node, and the _last MLP, over the full time window.
# Single gridless invocation; all operands fit trivially in VMEM (~0.4 MiB).
# Only the elementwise LIF recurrences stay serialized over T.
# ---------------------------------------------------------------------------
def mcq_kernel(state_bn_ref, pois_ref,
               w_emb_ref, b_emb_ref,
               w_bas_ref, w_api_ref,
               w_h1_ref, b_h1_ref, w_h2_ref, b_h2_ref,
               out_ref,
               spk_emb_ref, drive_ref, spk_mc_ref):
    # ---- phase 1: pop-encoding synaptic drive for ALL steps (one dot) ------
    # [T*BN, C]bf16 @ [C, D]bf16 -> [T*BN, D]f32
    psp_all = (
        jnp.dot(pois_ref[...], w_emb_ref[...], preferred_element_type=jnp.float32)
        + b_emb_ref[...]
    )

    # ---- phase 2: embedding LIF recurrence (elementwise only, f32) ---------
    v_emb = jnp.zeros((BN, D), jnp.float32)
    for t in range(T):
        v_emb = DECAY * v_emb + psp_all[t * BN:(t + 1) * BN, :]
        spk = (v_emb >= THR).astype(jnp.float32)
        spk_emb_ref[t * BN:(t + 1) * BN, :] = spk.astype(jnp.bfloat16)
        v_emb = v_emb * (1.0 - spk)

    # ---- phase 3: basal + apical drive for ALL steps (two batched dots) ----
    # Accumulate straight into VMEM scratch; no [T*BN, FUSION] SSA carried.
    drive_ref[...] = jnp.dot(state_bn_ref[...], w_bas_ref[...],
                             preferred_element_type=jnp.float32)
    drive_ref[...] += jnp.dot(spk_emb_ref[...], w_api_ref[...],
                              preferred_element_type=jnp.float32)

    # ---- phase 4: three-compartment soma LIF (elementwise only, f32) -------
    v_mc = jnp.zeros((BN, FUSION), jnp.float32)
    for t in range(T):
        v_mc = DECAY * v_mc + drive_ref[t * BN:(t + 1) * BN, :]
        spk = (v_mc >= THR).astype(jnp.float32)
        spk_mc_ref[t * BN:(t + 1) * BN, :] = spk.astype(jnp.bfloat16)
        v_mc = v_mc * (1.0 - spk)

    # ---- phase 5: _last hidden pre-activation for ALL steps (one dot) ------
    # [T*BN, FUSION]bf16 @ [FUSION, H]bf16 -> [T*BN, H]f32
    hpre_all = (
        jnp.dot(spk_mc_ref[...], w_h1_ref[...], preferred_element_type=jnp.float32)
        + b_h1_ref[...]
    )

    # ---- phase 6: hidden LIF recurrence + spike-count accumulation ---------
    v_h = jnp.zeros((BN, H), jnp.float32)
    spk_h_sum = jnp.zeros((BN, H), jnp.float32)
    for t in range(T):
        v_h = DECAY * v_h + hpre_all[t * BN:(t + 1) * BN, :]
        spk = (v_h >= THR).astype(jnp.float32)
        spk_h_sum = spk_h_sum + spk
        v_h = v_h * (1.0 - spk)

    # ---- phase 7: single output dot; fold 1/T scale and bias into epilogue -
    # sum_t (spk_h_t @ W + b) / T  ==  (sum_t spk_h_t) @ W / T + b
    out = jnp.dot(spk_h_sum.astype(jnp.bfloat16), w_h2_ref[...],
                  preferred_element_type=jnp.float32)
    out_ref[...] = out * (1.0 / T) + b_h2_ref[...]


_COST = pl.CostEstimate(
    flops=2 * (TBN * C * D            # pop-encoding dot
               + 2 * TBN * D * FUSION  # basal + apical dots
               + TBN * FUSION * H      # hidden dot
               + BN * H * A),          # output dot
    transcendentals=0,
    bytes_accessed=(TBN * D * 2 + TBN * C * 2        # state, poisson (bf16)
                    + C * D * 2 + D * 4              # w_emb, b_emb
                    + 2 * D * FUSION * 2              # w_bas, w_api
                    + FUSION * H * 2 + H * 4          # w_h1, b_h1
                    + H * A * 2 + A * 4               # w_h2, b_h2
                    + BN * A * 4),                    # output
)

_mcq_call = pl.pallas_call(
    mcq_kernel,
    out_shape=jax.ShapeDtypeStruct((BN, A), F32),
    scratch_shapes=[
        pltpu.VMEM((TBN, D), jnp.bfloat16),        # embedding spikes
        pltpu.VMEM((TBN, FUSION), jnp.float32),    # basal+apical drive
        pltpu.VMEM((TBN, FUSION), jnp.bfloat16),   # soma spikes
    ],
    cost_estimate=_COST,
)


def mc_quantiles(state_spk, pois, params):
    """state_spk: [T, B, D] spike train; pois: [T, BN, C] poisson counts."""
    # Row-repeat each batch row NF times (matches torch's basal_psp.unsqueeze(1)
    # broadcast over samples) and flatten time into the sublane axis so the
    # kernel sees lane-dense 2-D slabs.  Spikes / counts are exact in bf16.
    state_bn = jnp.repeat(state_spk, NF, axis=1).reshape(TBN, D).astype(BF16)
    pois_flat = pois.reshape(TBN, C).astype(BF16)

    out = _mcq_call(
        state_bn, pois_flat,
        params["w_emb"].astype(BF16), params["b_emb"],
        params["w_bas"].astype(BF16), params["w_api"].astype(BF16),
        params["w_h1"].astype(BF16), params["b_h1"],
        params["w_h2"].astype(BF16), params["b_h2"])

    # view(B, N, A).transpose(1, 2)  ->  [B, A, N]
    return jnp.transpose(out.reshape(B, NF, A), (0, 2, 1))


# ---------------------------------------------------------------------------
# Plain-JAX glue (tiny ops, left to XLA): preprocess net, fraction proposal +
# softmax/cumsum/entropy, Gaussian receptive fields, Poisson sampling.
# ---------------------------------------------------------------------------
def preprocess_spikes(s, w_pre, b_pre):
    """Synthetic spiking preprocess_net: Linear(S_IN -> D) driven for T steps
    through a LIF node; returns stacked spike trains [T, B, D]."""
    drive = s @ w_pre + b_pre

    def step(v, _):
        v = DECAY * v + drive
        spk = (v >= THR).astype(F32)
        v = v * (1.0 - spk)
        return v, spk

    _, spikes = jax.lax.scan(step, jnp.zeros_like(drive), None, length=T)
    return spikes


def fraction_proposal(logits_stacked, w_frac, b_frac):
    """SpikeFractionProposalNetwork: Linear on mean-over-time embedding, then
    softmax / cumsum / entropy (mean of affine == affine of mean)."""
    mean_logits = jnp.mean(logits_stacked, axis=0)            # [B, D]
    frac_logits = mean_logits @ w_frac + b_frac               # [B, NF]
    log_p = jax.nn.log_softmax(frac_logits, axis=-1)
    probs = jnp.exp(log_p)
    taus_1_N = jnp.cumsum(probs, axis=1)
    taus = jnp.pad(taus_1_N, ((0, 0), (1, 0)))                # [B, N+1]
    tau_hats = (taus[:, :-1] + taus[:, 1:]) / 2.0             # [B, N]
    entropies = -jnp.sum(probs * log_p, axis=-1)              # [B]
    return taus, tau_hats, entropies


def pop_encode_rates(tau_hats, mus):
    """SpikePopEncodingNetwork Gaussian receptive-field rates: [B, NF, C]."""
    diff = tau_hats[:, :, None] - mus[None, None, :]
    return R_MAX * jnp.exp(-(diff * diff) / (2.0 * SIGMA * SIGMA))


def spike_full_quantile_forward(s, params, key):
    # 1) preprocess_net -> per-step flattened state embeddings (spikes)
    logits_stacked = preprocess_spikes(s, params["w_pre"], params["b_pre"])  # [T,B,D]

    # 2) SpikeFractionProposalNetwork (plain JAX)
    taus, tau_hats, entropies = fraction_proposal(
        logits_stacked, params["w_frac"], params["b_frac"])

    # 3) SpikePopEncodingNetwork rates + Poisson sampling (torch.poisson
    #    semantics kept: raw integer counts feed the Linear(C -> D))
    rates = pop_encode_rates(tau_hats, params["mus"])          # [B, NF, C]
    rates_rep = jnp.broadcast_to(rates.reshape(BN, C), (T, BN, C))
    pois = jax.random.poisson(key, rates_rep).astype(F32)      # [T, BN, C]

    # 4) Fused pop-encoding Linear+LIF and MCQuantiles over the time window
    quantiles = mc_quantiles(logits_stacked, pois, params)     # [B, A, NF]

    quantiles_tau = None  # eval mode (self.training == False)
    h = None              # preprocess hidden state
    return (quantiles, (taus, tau_hats, entropies), quantiles_tau), h


forward_jit = jax.jit(spike_full_quantile_forward)


# ---------------------------------------------------------------------------
# Deterministic parameter init
# ---------------------------------------------------------------------------
def init_params(key):
    ks = jax.random.split(key, 10)

    def unif(k, shape, fan_in):
        lim = 1.0 / jnp.sqrt(jnp.asarray(fan_in, F32))
        return jax.random.uniform(k, shape, F32, -lim, lim)

    params = {
        # synthetic preprocess net
        "w_pre": unif(ks[0], (S_IN, D), S_IN),
        "b_pre": jnp.zeros((D,), F32),
        # fraction proposal net (xavier_uniform gain=0.01, bias=0)
        "w_frac": jax.random.uniform(
            ks[1], (D, NF), F32, -1.0, 1.0) * (0.01 * jnp.sqrt(6.0 / (D + NF))),
        "b_frac": jnp.zeros((1, NF), F32),
        # pop-encoding net: Linear(C -> D)
        "w_emb": unif(ks[2], (C, D), C),
        "b_emb": unif(ks[3], (1, D), C),
        # MCQuantiles: basal/apical (no bias), _last MLP
        "w_bas": unif(ks[4], (D, FUSION), D),
        "w_api": unif(ks[5], (D, FUSION), D),
        "w_h1": unif(ks[6], (FUSION, H), FUSION),
        "b_h1": unif(ks[7], (1, H), FUSION),
        "w_h2": unif(ks[8], (H, A), H),
        "b_h2": unif(ks[9], (1, A), H),
        # pop-encoding mus = arange(C)/C
        "mus": jnp.arange(C, dtype=F32) / C,
    }
    return params


# ---------------------------------------------------------------------------
if __name__ == "__main__":
    key = jax.random.PRNGKey(0)
    k_param, k_state, k_pois = jax.random.split(key, 3)

    params = init_params(k_param)
    s = jax.random.normal(k_state, (B, S_IN), F32)  # input state, layout [B, S_IN]

    (quantiles, (taus, tau_hats, entropies), quantiles_tau), h = forward_jit(
        s, params, k_pois)

    jax.block_until_ready(quantiles)
    jax.block_until_ready(taus)

    assert quantiles.shape == (B, A, NF)
    assert taus.shape == (B, NF + 1)
    assert tau_hats.shape == (B, NF)
    assert entropies.shape == (B,)
    assert bool(jnp.all(jnp.isfinite(quantiles)))
    assert bool(jnp.all(jnp.isfinite(taus)))

    print("KERNEL_OK")
</pallas_src>

<mosaic_0001>
module attributes {stable_mosaic.version = 11 : i64} {
  func.func @mcq_kernel(%arg0: memref<64x32xbf16, #tpu.memory_space<vmem>>, %arg1: memref<64x64xbf16, #tpu.memory_space<vmem>>, %arg2: memref<64x32xbf16, #tpu.memory_space<vmem>>, %arg3: memref<1x32xf32, #tpu.memory_space<vmem>>, %arg4: memref<32x512xbf16, #tpu.memory_space<vmem>>, %arg5: memref<32x512xbf16, #tpu.memory_space<vmem>>, %arg6: memref<512x32xbf16, #tpu.memory_space<vmem>>, %arg7: memref<1x32xf32, #tpu.memory_space<vmem>>, %arg8: memref<32x4xbf16, #tpu.memory_space<vmem>>, %arg9: memref<1x4xf32, #tpu.memory_space<vmem>>, %arg10: memref<16x4xf32, #tpu.memory_space<vmem>>, %arg11: memref<64x32xbf16, #tpu.memory_space<vmem>>, %arg12: memref<64x512xf32, #tpu.memory_space<vmem>>, %arg13: memref<64x512xbf16, #tpu.memory_space<vmem>>) attributes {dimension_semantics = [], scalar_prefetch = 0 : i64, scratch_operands = 3 : i64, tpu.core_type = #tpu.core_type<tc>} {
    %c0 = arith.constant 0 : index
    %c0_0 = arith.constant 0 : index
    %0 = vector.load %arg1[%c0, %c0_0] : memref<64x64xbf16, #tpu.memory_space<vmem>>, vector<64x64xbf16>
    %c0_1 = arith.constant 0 : index
    %c0_2 = arith.constant 0 : index
    %1 = vector.load %arg2[%c0_1, %c0_2] : memref<64x32xbf16, #tpu.memory_space<vmem>>, vector<64x32xbf16>
    %cst = arith.constant dense<0.000000e+00> : vector<64x32xf32>
    %2 = tpu.matmul %0, %1, %cst {dimension_numbers = #tpu.dot_dimension_numbers<[1], [0], [0], [1], [0, 0, 1, 1], [], []>} : vector<64x64xbf16>, vector<64x32xbf16>, vector<64x32xf32> -> vector<64x32xf32>
    %c0_3 = arith.constant 0 : index
    %c0_4 = arith.constant 0 : index
    %3 = vector.load %arg3[%c0_3, %c0_4] : memref<1x32xf32, #tpu.memory_space<vmem>>, vector<1x32xf32>
    %4 = vector.broadcast %3 : vector<1x32xf32> to vector<64x32xf32>
    %5 = arith.addf %2, %4 : vector<64x32xf32>
    %cst_5 = arith.constant 0.000000e+00 : f32
    %6 = vector.broadcast %cst_5 : f32 to vector<16x32xf32>
    %cst_6 = arith.constant 5.000000e-01 : f32
    %7 = vector.broadcast %cst_6 : f32 to vector<16x32xf32>
    %8 = arith.mulf %7, %6 : vector<16x32xf32>
    %9 = vector.extract_strided_slice %5 {offsets = [0, 0], sizes = [16, 32], strides = [1, 1]} : vector<64x32xf32> to vector<16x32xf32>
    %10 = arith.addf %8, %9 : vector<16x32xf32>
    %cst_7 = arith.constant 5.000000e-01 : f32
    %11 = vector.broadcast %cst_7 : f32 to vector<16x32xf32>
    %12 = arith.cmpf oge, %10, %11 : vector<16x32xf32>
    %13 = arith.extui %12 : vector<16x32xi1> to vector<16x32xi32>
    %14 = arith.sitofp %13 : vector<16x32xi32> to vector<16x32xf32>
    %15 = arith.truncf %14 : vector<16x32xf32> to vector<16x32xbf16>
    %c0_8 = arith.constant 0 : index
    %c0_9 = arith.constant 0 : index
    %16 = vector.load %arg11[%c0_8, %c0_9] : memref<64x32xbf16, #tpu.memory_space<vmem>>, vector<16x32xbf16>
    tpu.vector_store %arg11[%c0_8, %c0_9], %15 {strides = array<i32>} : memref<64x32xbf16, #tpu.memory_space<vmem>>, vector<16x32xbf16>,
    %cst_10 = arith.constant 1.000000e+00 : f32
    %17 = vector.broadcast %cst_10 : f32 to vector<16x32xf32>
    %18 = arith.subf %17, %14 : vector<16x32xf32>
    %19 = arith.mulf %10, %18 : vector<16x32xf32>
    %cst_11 = arith.constant 5.000000e-01 : f32
    %20 = vector.broadcast %cst_11 : f32 to vector<16x32xf32>
    %21 = arith.mulf %20, %19 : vector<16x32xf32>
    %22 = vector.extract_strided_slice %5 {offsets = [16, 0], sizes = [16, 32], strides = [1, 1]} : vector<64x32xf32> to vector<16x32xf32>
    %23 = arith.addf %21, %22 : vector<16x32xf32>
    %cst_12 = arith.constant 5.000000e-01 : f32
    %24 = vector.broadcast %cst_12 : f32 to vector<16x32xf32>
    %25 = arith.cmpf oge, %23, %24 : vector<16x32xf32>
    %26 = arith.extui %25 : vector<16x32xi1> to vector<16x32xi32>
    %27 = arith.sitofp %26 : vector<16x32xi32> to vector<16x32xf32>
    %28 = arith.truncf %27 : vector<16x32xf32> to vector<16x32xbf16>
    %c16 = arith.constant 16 : index
    %c0_13 = arith.constant 0 : index
    %29 = vector.load %arg11[%c16, %c0_13] : memref<64x32xbf16, #tpu.memory_space<vmem>>, vector<16x32xbf16>
    tpu.vector_store %arg11[%c16, %c0_13], %28 {strides = array<i32>} : memref<64x32xbf16, #tpu.memory_space<vmem>>, vector<16x32xbf16>,
    %cst_14 = arith.constant 1.000000e+00 : f32
    %30 = vector.broadcast %cst_14 : f32 to vector<16x32xf32>
    %31 = arith.subf %30, %27 : vector<16x32xf32>
    %32 = arith.mulf %23, %31 : vector<16x32xf32>
    %cst_15 = arith.constant 5.000000e-01 : f32
    %33 = vector.broadcast %cst_15 : f32 to vector<16x32xf32>
    %34 = arith.mulf %33, %32 : vector<16x32xf32>
    %35 = vector.extract_strided_slice %5 {offsets = [32, 0], sizes = [16, 32], strides = [1, 1]} : vector<64x32xf32> to vector<16x32xf32>
    %36 = arith.addf %34, %35 : vector<16x32xf32>
    %cst_16 = arith.constant 5.000000e-01 : f32
    %37 = vector.broadcast %cst_16 : f32 to vector<16x32xf32>
    %38 = arith.cmpf oge, %36, %37 : vector<16x32xf32>
    %39 = arith.extui %38 : vector<16x32xi1> to vector<16x32xi32>
    %40 = arith.sitofp %39 : vector<16x32xi32> to vector<16x32xf32>
    %41 = arith.truncf %40 : vector<16x32xf32> to vector<16x32xbf16>
    %c32 = arith.constant 32 : index
    %c0_17 = arith.constant 0 : index
    %42 = vector.load %arg11[%c32, %c0_17] : memref<64x32xbf16, #tpu.memory_space<vmem>>, vector<16x32xbf16>
    tpu.vector_store %arg11[%c32, %c0_17], %41 {strides = array<i32>} : memref<64x32xbf16, #tpu.memory_space<vmem>>, vector<16x32xbf16>,
    %cst_18 = arith.constant 1.000000e+00 : f32
    %43 = vector.broadcast %cst_18 : f32 to vector<16x32xf32>
    %44 = arith.subf %43, %40 : vector<16x32xf32>
    %45 = arith.mulf %36, %44 : vector<16x32xf32>
    %cst_19 = arith.constant 5.000000e-01 : f32
    %46 = vector.broadcast %cst_19 : f32 to vector<16x32xf32>
    %47 = arith.mulf %46, %45 : vector<16x32xf32>
    %48 = vector.extract_strided_slice %5 {offsets = [48, 0], sizes = [16, 32], strides = [1, 1]} : vector<64x32xf32> to vector<16x32xf32>
    %49 = arith.addf %47, %48 : vector<16x32xf32>
    %cst_20 = arith.constant 5.000000e-01 : f32
    %50 = vector.broadcast %cst_20 : f32 to vector<16x32xf32>
    %51 = arith.cmpf oge, %49, %50 : vector<16x32xf32>
    %52 = arith.extui %51 : vector<16x32xi1> to vector<16x32xi32>
    %53 = arith.sitofp %52 : vector<16x32xi32> to vector<16x32xf32>
    %54 = arith.truncf %53 : vector<16x32xf32> to vector<16x32xbf16>
    %c48 = arith.constant 48 : index
    %c0_21 = arith.constant 0 : index
    %55 = vector.load %arg11[%c48, %c0_21] : memref<64x32xbf16, #tpu.memory_space<vmem>>, vector<16x32xbf16>
    tpu.vector_store %arg11[%c48, %c0_21], %54 {strides = array<i32>} : memref<64x32xbf16, #tpu.memory_space<vmem>>, vector<16x32xbf16>,
    %c0_22 = arith.constant 0 : index
    %c0_23 = arith.constant 0 : index
    %56 = vector.load %arg0[%c0_22, %c0_23] : memref<64x32xbf16, #tpu.memory_space<vmem>>, vector<64x32xbf16>
    %c0_24 = arith.constant 0 : index
    %c0_25 = arith.constant 0 : index
    %57 = vector.load %arg4[%c0_24, %c0_25] : memref<32x512xbf16, #tpu.memory_space<vmem>>, vector<32x512xbf16>
    %cst_26 = arith.constant dense<0.000000e+00> : vector<64x512xf32>
    %58 = tpu.matmul %56, %57, %cst_26 {dimension_numbers = #tpu.dot_dimension_numbers<[1], [0], [0], [1], [0, 0, 1, 1], [], []>} : vector<64x32xbf16>, vector<32x512xbf16>, vector<64x512xf32> -> vector<64x512xf32>
    %c0_27 = arith.constant 0 : index
    %c0_28 = arith.constant 0 : index
    %59 = vector.load %arg12[%c0_27, %c0_28] : memref<64x512xf32, #tpu.memory_space<vmem>>, vector<64x512xf32>
    tpu.vector_store %arg12[%c0_27, %c0_28], %58 {strides = array<i32>} : memref<64x512xf32, #tpu.memory_space<vmem>>, vector<64x512xf32>,
    %c0_29 = arith.constant 0 : index
    %c0_30 = arith.constant 0 : index
    %60 = vector.load %arg12[%c0_29, %c0_30] : memref<64x512xf32, #tpu.memory_space<vmem>>, vector<64x512xf32>
    %c0_31 = arith.constant 0 : index
    %c0_32 = arith.constant 0 : index
    %61 = vector.load %arg11[%c0_31, %c0_32] : memref<64x32xbf16, #tpu.memory_space<vmem>>, vector<64x32xbf16>
    %c0_33 = arith.constant 0 : index
    %c0_34 = arith.constant 0 : index
    %62 = vector.load %arg5[%c0_33, %c0_34] : memref<32x512xbf16, #tpu.memory_space<vmem>>, vector<32x512xbf16>
    %cst_35 = arith.constant dense<0.000000e+00> : vector<64x512xf32>
    %63 = tpu.matmul %61, %62, %cst_35 {dimension_numbers = #tpu.dot_dimension_numbers<[1], [0], [0], [1], [0, 0, 1, 1], [], []>} : vector<64x32xbf16>, vector<32x512xbf16>, vector<64x512xf32> -> vector<64x512xf32>
    %64 = arith.addf %60, %63 : vector<64x512xf32>
    %c0_36 = arith.constant 0 : index
    %c0_37 = arith.constant 0 : index
    %65 = vector.load %arg12[%c0_36, %c0_37] : memref<64x512xf32, #tpu.memory_space<vmem>>, vector<64x512xf32>
    tpu.vector_store %arg12[%c0_36, %c0_37], %64 {strides = array<i32>} : memref<64x512xf32, #tpu.memory_space<vmem>>, vector<64x512xf32>,
    %cst_38 = arith.constant 0.000000e+00 : f32
    %66 = vector.broadcast %cst_38 : f32 to vector<16x512xf32>
    %cst_39 = arith.constant 5.000000e-01 : f32
    %67 = vector.broadcast %cst_39 : f32 to vector<16x512xf32>
    %68 = arith.mulf %67, %66 : vector<16x512xf32>
    %c0_40 = arith.constant 0 : index
    %c0_41 = arith.constant 0 : index
    %69 = vector.load %arg12[%c0_40, %c0_41] : memref<64x512xf32, #tpu.memory_space<vmem>>, vector<16x512xf32>
    %70 = arith.addf %68, %69 : vector<16x512xf32>
    %cst_42 = arith.constant 5.000000e-01 : f32
    %71 = vector.broadcast %cst_42 : f32 to vector<16x512xf32>
    %72 = arith.cmpf oge, %70, %71 : vector<16x512xf32>
    %73 = arith.extui %72 : vector<16x512xi1> to vector<16x512xi32>
    %74 = arith.sitofp %73 : vector<16x512xi32> to vector<16x512xf32>
    %75 = arith.truncf %74 : vector<16x512xf32> to vector<16x512xbf16>
    %c0_43 = arith.constant 0 : index
    %c0_44 = arith.constant 0 : index
    %76 = vector.load %arg13[%c0_43, %c0_44] : memref<64x512xbf16, #tpu.memory_space<vmem>>, vector<16x512xbf16>
    tpu.vector_store %arg13[%c0_43, %c0_44], %75 {strides = array<i32>} : memref<64x512xbf16, #tpu.memory_space<vmem>>, vector<16x512xbf16>,
    %cst_45 = arith.constant 1.000000e+00 : f32
    %77 = vector.broadcast %cst_45 : f32 to vector<16x512xf32>
    %78 = arith.subf %77, %74 : vector<16x512xf32>
    %79 = arith.mulf %70, %78 : vector<16x512xf32>
    %cst_46 = arith.constant 5.000000e-01 : f32
    %80 = vector.broadcast %cst_46 : f32 to vector<16x512xf32>
    %81 = arith.mulf %80, %79 : vector<16x512xf32>
    %c16_47 = arith.constant 16 : index
    %c0_48 = arith.constant 0 : index
    %82 = vector.load %arg12[%c16_47, %c0_48] : memref<64x512xf32, #tpu.memory_space<vmem>>, vector<16x512xf32>
    %83 = arith.addf %81, %82 : vector<16x512xf32>
    %cst_49 = arith.constant 5.000000e-01 : f32
    %84 = vector.broadcast %cst_49 : f32 to vector<16x512xf32>
    %85 = arith.cmpf oge, %83, %84 : vector<16x512xf32>
    %86 = arith.extui %85 : vector<16x512xi1> to vector<16x512xi32>
    %87 = arith.sitofp %86 : vector<16x512xi32> to vector<16x512xf32>
    %88 = arith.truncf %87 : vector<16x512xf32> to vector<16x512xbf16>
    %c16_50 = arith.constant 16 : index
    %c0_51 = arith.constant 0 : index
    %89 = vector.load %arg13[%c16_50, %c0_51] : memref<64x512xbf16, #tpu.memory_space<vmem>>, vector<16x512xbf16>
    tpu.vector_store %arg13[%c16_50, %c0_51], %88 {strides = array<i32>} : memref<64x512xbf16, #tpu.memory_space<vmem>>, vector<16x512xbf16>,
    %cst_52 = arith.constant 1.000000e+00 : f32
    %90 = vector.broadcast %cst_52 : f32 to vector<16x512xf32>
    %91 = arith.subf %90, %87 : vector<16x512xf32>
    %92 = arith.mulf %83, %91 : vector<16x512xf32>
    %cst_53 = arith.constant 5.000000e-01 : f32
    %93 = vector.broadcast %cst_53 : f32 to vector<16x512xf32>
    %94 = arith.mulf %93, %92 : vector<16x512xf32>
    %c32_54 = arith.constant 32 : index
    %c0_55 = arith.constant 0 : index
    %95 = vector.load %arg12[%c32_54, %c0_55] : memref<64x512xf32, #tpu.memory_space<vmem>>, vector<16x512xf32>
    %96 = arith.addf %94, %95 : vector<16x512xf32>
    %cst_56 = arith.constant 5.000000e-01 : f32
    %97 = vector.broadcast %cst_56 : f32 to vector<16x512xf32>
    %98 = arith.cmpf oge, %96, %97 : vector<16x512xf32>
    %99 = arith.extui %98 : vector<16x512xi1> to vector<16x512xi32>
    %100 = arith.sitofp %99 : vector<16x512xi32> to vector<16x512xf32>
    %101 = arith.truncf %100 : vector<16x512xf32> to vector<16x512xbf16>
    %c32_57 = arith.constant 32 : index
    %c0_58 = arith.constant 0 : index
    %102 = vector.load %arg13[%c32_57, %c0_58] : memref<64x512xbf16, #tpu.memory_space<vmem>>, vector<16x512xbf16>
    tpu.vector_store %arg13[%c32_57, %c0_58], %101 {strides = array<i32>} : memref<64x512xbf16, #tpu.memory_space<vmem>>, vector<16x512xbf16>,
    %cst_59 = arith.constant 1.000000e+00 : f32
    %103 = vector.broadcast %cst_59 : f32 to vector<16x512xf32>
    %104 = arith.subf %103, %100 : vector<16x512xf32>
    %105 = arith.mulf %96, %104 : vector<16x512xf32>
    %cst_60 = arith.constant 5.000000e-01 : f32
    %106 = vector.broadcast %cst_60 : f32 to vector<16x512xf32>
    %107 = arith.mulf %106, %105 : vector<16x512xf32>
    %c48_61 = arith.constant 48 : index
    %c0_62 = arith.constant 0 : index
    %108 = vector.load %arg12[%c48_61, %c0_62] : memref<64x512xf32, #tpu.memory_space<vmem>>, vector<16x512xf32>
    %109 = arith.addf %107, %108 : vector<16x512xf32>
    %cst_63 = arith.constant 5.000000e-01 : f32
    %110 = vector.broadcast %cst_63 : f32 to vector<16x512xf32>
    %111 = arith.cmpf oge, %109, %110 : vector<16x512xf32>
    %112 = arith.extui %111 : vector<16x512xi1> to vector<16x512xi32>
    %113 = arith.sitofp %112 : vector<16x512xi32> to vector<16x512xf32>
    %114 = arith.truncf %113 : vector<16x512xf32> to vector<16x512xbf16>
    %c48_64 = arith.constant 48 : index
    %c0_65 = arith.constant 0 : index
    %115 = vector.load %arg13[%c48_64, %c0_65] : memref<64x512xbf16, #tpu.memory_space<vmem>>, vector<16x512xbf16>
    tpu.vector_store %arg13[%c48_64, %c0_65], %114 {strides = array<i32>} : memref<64x512xbf16, #tpu.memory_space<vmem>>, vector<16x512xbf16>,
    %c0_66 = arith.constant 0 : index
    %c0_67 = arith.constant 0 : index
    %116 = vector.load %arg13[%c0_66, %c0_67] : memref<64x512xbf16, #tpu.memory_space<vmem>>, vector<64x512xbf16>
    %c0_68 = arith.constant 0 : index
    %c0_69 = arith.constant 0 : index
    %117 = vector.load %arg6[%c0_68, %c0_69] : memref<512x32xbf16, #tpu.memory_space<vmem>>, vector<512x32xbf16>
    %cst_70 = arith.constant dense<0.000000e+00> : vector<64x32xf32>
    %118 = tpu.matmul %116, %117, %cst_70 {dimension_numbers = #tpu.dot_dimension_numbers<[1], [0], [0], [1], [0, 0, 1, 1], [], []>} : vector<64x512xbf16>, vector<512x32xbf16>, vector<64x32xf32> -> vector<64x32xf32>
    %c0_71 = arith.constant 0 : index
    %c0_72 = arith.constant 0 : index
    %119 = vector.load %arg7[%c0_71, %c0_72] : memref<1x32xf32, #tpu.memory_space<vmem>>, vector<1x32xf32>
    %120 = vector.broadcast %119 : vector<1x32xf32> to vector<64x32xf32>
    %121 = arith.addf %118, %120 : vector<64x32xf32>
    %cst_73 = arith.constant 0.000000e+00 : f32
    %122 = vector.broadcast %cst_73 : f32 to vector<16x32xf32>
    %cst_74 = arith.constant 0.000000e+00 : f32
    %123 = vector.broadcast %cst_74 : f32 to vector<16x32xf32>
    %cst_75 = arith.constant 5.000000e-01 : f32
    %124 = vector.broadcast %cst_75 : f32 to vector<16x32xf32>
    %125 = arith.mulf %124, %122 : vector<16x32xf32>
    %126 = vector.extract_strided_slice %121 {offsets = [0, 0], sizes = [16, 32], strides = [1, 1]} : vector<64x32xf32> to vector<16x32xf32>
    %127 = arith.addf %125, %126 : vector<16x32xf32>
    %cst_76 = arith.constant 5.000000e-01 : f32
    %128 = vector.broadcast %cst_76 : f32 to vector<16x32xf32>
    %129 = arith.cmpf oge, %127, %128 : vector<16x32xf32>
    %130 = arith.extui %129 : vector<16x32xi1> to vector<16x32xi32>
    %131 = arith.sitofp %130 : vector<16x32xi32> to vector<16x32xf32>
    %132 = arith.addf %123, %131 : vector<16x32xf32>
    %cst_77 = arith.constant 1.000000e+00 : f32
    %133 = vector.broadcast %cst_77 : f32 to vector<16x32xf32>
    %134 = arith.subf %133, %131 : vector<16x32xf32>
    %135 = arith.mulf %127, %134 : vector<16x32xf32>
    %cst_78 = arith.constant 5.000000e-01 : f32
    %136 = vector.broadcast %cst_78 : f32 to vector<16x32xf32>
    %137 = arith.mulf %136, %135 : vector<16x32xf32>
    %138 = vector.extract_strided_slice %121 {offsets = [16, 0], sizes = [16, 32], strides = [1, 1]} : vector<64x32xf32> to vector<16x32xf32>
    %139 = arith.addf %137, %138 : vector<16x32xf32>
    %cst_79 = arith.constant 5.000000e-01 : f32
    %140 = vector.broadcast %cst_79 : f32 to vector<16x32xf32>
    %141 = arith.cmpf oge, %139, %140 : vector<16x32xf32>
    %142 = arith.extui %141 : vector<16x32xi1> to vector<16x32xi32>
    %143 = arith.sitofp %142 : vector<16x32xi32> to vector<16x32xf32>
    %144 = arith.addf %132, %143 : vector<16x32xf32>
    %cst_80 = arith.constant 1.000000e+00 : f32
    %145 = vector.broadcast %cst_80 : f32 to vector<16x32xf32>
    %146 = arith.subf %145, %143 : vector<16x32xf32>
    %147 = arith.mulf %139, %146 : vector<16x32xf32>
    %cst_81 = arith.constant 5.000000e-01 : f32
    %148 = vector.broadcast %cst_81 : f32 to vector<16x32xf32>
    %149 = arith.mulf %148, %147 : vector<16x32xf32>
    %150 = vector.extract_strided_slice %121 {offsets = [32, 0], sizes = [16, 32], strides = [1, 1]} : vector<64x32xf32> to vector<16x32xf32>
    %151 = arith.addf %149, %150 : vector<16x32xf32>
    %cst_82 = arith.constant 5.000000e-01 : f32
    %152 = vector.broadcast %cst_82 : f32 to vector<16x32xf32>
    %153 = arith.cmpf oge, %151, %152 : vector<16x32xf32>
    %154 = arith.extui %153 : vector<16x32xi1> to vector<16x32xi32>
    %155 = arith.sitofp %154 : vector<16x32xi32> to vector<16x32xf32>
    %156 = arith.addf %144, %155 : vector<16x32xf32>
    %cst_83 = arith.constant 1.000000e+00 : f32
    %157 = vector.broadcast %cst_83 : f32 to vector<16x32xf32>
    %158 = arith.subf %157, %155 : vector<16x32xf32>
    %159 = arith.mulf %151, %158 : vector<16x32xf32>
    %cst_84 = arith.constant 5.000000e-01 : f32
    %160 = vector.broadcast %cst_84 : f32 to vector<16x32xf32>
    %161 = arith.mulf %160, %159 : vector<16x32xf32>
    %162 = vector.extract_strided_slice %121 {offsets = [48, 0], sizes = [16, 32], strides = [1, 1]} : vector<64x32xf32> to vector<16x32xf32>
    %163 = arith.addf %161, %162 : vector<16x32xf32>
    %cst_85 = arith.constant 5.000000e-01 : f32
    %164 = vector.broadcast %cst_85 : f32 to vector<16x32xf32>
    %165 = arith.cmpf oge, %163, %164 : vector<16x32xf32>
    %166 = arith.extui %165 : vector<16x32xi1> to vector<16x32xi32>
    %167 = arith.sitofp %166 : vector<16x32xi32> to vector<16x32xf32>
    %168 = arith.addf %156, %167 : vector<16x32xf32>
    %169 = arith.truncf %168 : vector<16x32xf32> to vector<16x32xbf16>
    %c0_86 = arith.constant 0 : index
    %c0_87 = arith.constant 0 : index
    %170 = vector.load %arg8[%c0_86, %c0_87] : memref<32x4xbf16, #tpu.memory_space<vmem>>, vector<32x4xbf16>
    %cst_88 = arith.constant dense<0.000000e+00> : vector<16x4xf32>
    %171 = tpu.matmul %169, %170, %cst_88 {dimension_numbers = #tpu.dot_dimension_numbers<[1], [0], [0], [1], [0, 0, 1, 1], [], []>} : vector<16x32xbf16>, vector<32x4xbf16>, vector<16x4xf32> -> vector<16x4xf32>
    %cst_89 = arith.constant 2.500000e-01 : f32
    %172 = vector.broadcast %cst_89 : f32 to vector<16x4xf32>
    %173 = arith.mulf %171, %172 : vector<16x4xf32>
    %c0_90 = arith.constant 0 : index
    %c0_91 = arith.constant 0 : index
    %174 = vector.load %arg9[%c0_90, %c0_91] : memref<1x4xf32, #tpu.memory_space<vmem>>, vector<1x4xf32>
    %175 = vector.broadcast %174 : vector<1x4xf32> to vector<16x4xf32>
    %176 = arith.addf %173, %175 : vector<16x4xf32>
    %c0_92 = arith.constant 0 : index
    %c0_93 = arith.constant 0 : index
    %177 = vector.load %arg10[%c0_92, %c0_93] : memref<16x4xf32, #tpu.memory_space<vmem>>, vector<16x4xf32>
    tpu.vector_store %arg10[%c0_92, %c0_93], %176 {strides = array<i32>} : memref<16x4xf32, #tpu.memory_space<vmem>>, vector<16x4xf32>,
    return
  }
}

</mosaic_0001>

<llo_original>
// kernel: custom-call
$region0: #{custom-call}
  %s0 = inlined_call_operand.vmem [shape: f32[2,32], index: 0, kind: output, shape index: {}]

// kernel: custom-call.1
$region0: #{custom-call.1}
  %s0 = inlined_call_operand.vmem [shape: f32[4,2,32], index: 0, kind: output, shape index: {}]

// kernel: neg.8
$region0: #{neg.8}
  #allocation2 [shape = 's32[1]{0}', space=sflag, size = 0x4, scoped, tag = 'scoped memory for neg.8']
  %s0 = inlined_call_operand.vmem [shape: f32[2], index: 0, kind: input, shape index: {}]
  %s1 = inlined_call_operand.hbm [shape: f32[2], index: 1, kind: output, shape index: {}]
  $region1: #{neg.8} parent=0
    #allocation0 [shape = 'u8[512]{0}', space=vmem, size = 0x400, scoped, tag = 'operand span for operand 1']
    #allocation1 [shape = 's32[1]{0}', space=sflag, size = 0x4, scoped, tag = 'scoped memory for neg.8']
    %2 = vsyncpa [#allocation1], 0
    %v3 = vld [vmem:[%s0] sm:$0x1]
    %4 = xla_tuple %v3
    %5 = xla_tuple %4
    %v6 = vxor.u32 %v3, 2147483648
    %7 = xla_tuple %v6
    %8 = vst [vmem:[#allocation0] sm:$0x1] %v6
    %10 = vsyncadd [#allocation1], 0
    %s12 = sshll.u32 [#allocation0], 4
    %s13 = int_to_ptr.vmem [resolvable:$true] %s12
    %s14 = sshll.u32 %s1, 4
    %s15 = int_to_ptr.hbm [resolvable:$true] %s14
    %17 = dma.vmem_to_hbm [thread:$0]  %s13, 16, %s15, [#allocation1]
    %19 = dma.done [#allocation1], 16
    %20 = vsyncpa [#allocation1], 1

// kernel: spike_full_quantile_forward.1
$region0: #{spike_full_quantile_forward.1}
  #allocation0 [shape = 'u32[]', space=smem, size = 0x4, offset = 0x4, fixed_abs, tag = 'smem constant byte address 0x4 - core index']
  #allocation1 [shape = 'u32[72,128]{1,0:T(1,128)}', space=vmem, size = 0x9000, scoped, tag = 'internal scratch']
  #allocation2 [shape = 'bf16[64,32]{1,0:T(8,128)(2,1)}', space=vmem, size = 0x4000, scoped, tag = 'scratch operand']
  #allocation3 [shape = 'f32[64,512]{1,0:T(8,128)}', space=vmem, size = 0x20000, scoped, tag = 'scratch operand']
  #allocation4 [shape = 'bf16[64,512]{1,0:T(8,128)(2,1)}', space=vmem, size = 0x10000, scoped, tag = 'scratch operand']
  %s0 = inlined_call_operand.vmem [shape: bf16[64,32], index: 0, kind: input, shape index: {}]
  %s1 = inlined_call_operand.vmem [shape: bf16[64,64], index: 1, kind: input, shape index: {}]
  %s2 = inlined_call_operand.vmem [shape: bf16[64,32], index: 2, kind: input, shape index: {}]
  %s3 = inlined_call_operand.vmem [shape: f32[1,32], index: 3, kind: input, shape index: {}]
  %s4 = inlined_call_operand.vmem [shape: bf16[32,512], index: 4, kind: input, shape index: {}]
  %s5 = inlined_call_operand.vmem [shape: bf16[32,512], index: 5, kind: input, shape index: {}]
  %s6 = inlined_call_operand.vmem [shape: bf16[512,32], index: 6, kind: input, shape index: {}]
  %s7 = inlined_call_operand.vmem [shape: f32[1,32], index: 7, kind: input, shape index: {}]
  %s8 = inlined_call_operand.vmem [shape: bf16[32,4], index: 8, kind: input, shape index: {}]
  %s9 = inlined_call_operand.vmem [shape: f32[1,4], index: 9, kind: input, shape index: {}]
  %s10 = inlined_call_operand.vmem [shape: f32[16,4], index: 10, kind: output, shape index: {}]
  %s11 = sld [smem:[#allocation0]]
  $region50: #{spike_full_quantile_forward.1} parent=0
    _
  %s13 = ssub.s32 1, %s11
  %s14 = scalar_select 0, %s13, %s11
  // Predicated region
  $region2: #{spike_full_quantile_forward.1} parent=0 // pred_check
    _
  $region3: #{spike_full_quantile_forward.1} parent=0 // pred_check_branch
    %16 = sbr.rel (0) target = $region5
  $region4: #{spike_full_quantile_forward.1} parent=0 // pred_region
    _
  $region5: #{spike_full_quantile_forward.1} parent=0 // pred_fallthru
    _
  // Predicated region
  $region6: #{spike_full_quantile_forward.1} parent=0 // pred_check
    _
  $region7: #{spike_full_quantile_forward.1} parent=0 // pred_check_branch
    %18 = sbr.rel (0) target = $region9
  $region8: #{spike_full_quantile_forward.1} parent=0 // pred_region
    _
  $region9: #{spike_full_quantile_forward.1} parent=0 // pred_fallthru
    _
  // Predicated region
  $region10: #{spike_full_quantile_forward.1} parent=0 // pred_check
    _
  $region11: #{spike_full_quantile_forward.1} parent=0 // pred_check_branch
    %20 = sbr.rel (0) target = $region13
  $region12: #{spike_full_quantile_forward.1} parent=0 // pred_region
    _
  $region13: #{spike_full_quantile_forward.1} parent=0 // pred_fallthru
    _
  // Predicated region
  $region14: #{spike_full_quantile_forward.1} parent=0 // pred_check
    _
  $region15: #{spike_full_quantile_forward.1} parent=0 // pred_check_branch
    %22 = sbr.rel (0) target = $region17
  $region16: #{spike_full_quantile_forward.1} parent=0 // pred_region
    _
  $region17: #{spike_full_quantile_forward.1} parent=0 // pred_fallthru
    _
  // Predicated region
  $region18: #{spike_full_quantile_forward.1} parent=0 // pred_check
    _
  $region19: #{spike_full_quantile_forward.1} parent=0 // pred_check_branch
    %24 = sbr.rel (0) target = $region21
  $region20: #{spike_full_quantile_forward.1} parent=0 // pred_region
    _
  $region21: #{spike_full_quantile_forward.1} parent=0 // pred_fallthru
    _
  // Predicated region
  $region22: #{spike_full_quantile_forward.1} parent=0 // pred_check
    _
  $region23: #{spike_full_quantile_forward.1} parent=0 // pred_check_branch
    %26 = sbr.rel (0) target = $region25
  $region24: #{spike_full_quantile_forward.1} parent=0 // pred_region
    _
  $region25: #{spike_full_quantile_forward.1} parent=0 // pred_fallthru
    _
  // Predicated region
  $region26: #{spike_full_quantile_forward.1} parent=0 // pred_check
    _
  $region27: #{spike_full_quantile_forward.1} parent=0 // pred_check_branch
    %28 = sbr.rel (0) target = $region29
  $region28: #{spike_full_quantile_forward.1} parent=0 // pred_region
    _
  $region29: #{spike_full_quantile_forward.1} parent=0 // pred_fallthru
    _
  // Predicated region
  $region30: #{spike_full_quantile_forward.1} parent=0 // pred_check
    _
  $region31: #{spike_full_quantile_forward.1} parent=0 // pred_check_branch
    %30 = sbr.rel (0) target = $region33
  $region32: #{spike_full_quantile_forward.1} parent=0 // pred_region
    _
  $region33: #{spike_full_quantile_forward.1} parent=0 // pred_fallthru
    _
  // Predicated region
  $region34: #{spike_full_quantile_forward.1} parent=0 // pred_check
    _
  $region35: #{spike_full_quantile_forward.1} parent=0 // pred_check_branch
    %32 = sbr.rel (0) target = $region37
  $region36: #{spike_full_quantile_forward.1} parent=0 // pred_region
    _
  $region37: #{spike_full_quantile_forward.1} parent=0 // pred_fallthru
    _
  // Predicated region
  $region38: #{spike_full_quantile_forward.1} parent=0 // pred_check
    _
  $region39: #{spike_full_quantile_forward.1} parent=0 // pred_check_branch
    %34 = sbr.rel (0) target = $region41
  $region40: #{spike_full_quantile_forward.1} parent=0 // pred_region
    _
  $region41: #{spike_full_quantile_forward.1} parent=0 // pred_fallthru
    _
  %v36 = vld [vmem:[%s1] sm:$0xf]
  %v37 = vld [vmem:[%s1 + $0x4] sm:$0xf]
  %v38 = vld [vmem:[%s1 + $0x8] sm:$0xf]
  %v39 = vld [vmem:[%s1 + $0xc] sm:$0xf]
  %v40 = vld [vmem:[%s1 + $0x10] sm:$0xf]
  %v41 = vld [vmem:[%s1 + $0x14] sm:$0xf]
  %v42 = vld [vmem:[%s1 + $0x18] sm:$0xf]
  %v43 = vld [vmem:[%s1 + $0x1c] sm:$0xf]
  %v44 = vld [vmem:[%s2] sm:$0xf]
  %v45 = vld [vmem:[%s2 + $0x4] sm:$0xf]
  %v46 = vld [vmem:[%s2 + $0x8] sm:$0xf]
  %v47 = vld [vmem:[%s2 + $0xc] sm:$0xf]
  %v48 = vld [vmem:[%s2 + $0x10] sm:$0xf]
  %v49 = vld [vmem:[%s2 + $0x14] sm:$0xf]
  %v50 = vld [vmem:[%s2 + $0x18] sm:$0xf]
  %v51 = vld [vmem:[%s2 + $0x1c] sm:$0xf]
  %v52 = vld [vmem:[%s3] sm:$0x1]
  %v54 = vperm.slane %v52, 0
  %v64 = vunpack.c.l.b16 %v36
  %v65 = vunpack.c.l.b16 %v37
  %v66 = vunpack.c.l.b16 %v38
  %v67 = vunpack.c.l.b16 %v39
  %v68 = vunpack.c.l.b16 %v40
  %v69 = vunpack.c.l.b16 %v41
  %v70 = vunpack.c.l.b16 %v42
  %v71 = vunpack.c.l.b16 %v43
  %v72 = vpack.c.b16 %v65, %v64
  %v73 = vpack.c.b16 %v67, %v66
  %v74 = vpack.c.b16 %v69, %v68
  %v75 = vpack.c.b16 %v71, %v70
  %v84 = vunpack.c.l.b16 %v44
  %v85 = vunpack.c.l.b16 %v45
  %v86 = vunpack.c.l.b16 %v46
  %v87 = vunpack.c.l.b16 %v47
  %v88 = vunpack.c.l.b16 %v48
  %v89 = vunpack.c.l.b16 %v49
  %v90 = vunpack.c.l.b16 %v50
  %v91 = vunpack.c.l.b16 %v51
  %v92 = vpack.c.b16 %v85, %v84
  %v93 = vpack.c.b16 %v87, %v86
  %v94 = vpack.c.b16 %v89, %v88
  %v95 = vpack.c.b16 %v91, %v90
  %vm100 = vcmask 523264
  %v102 = vsel %vm100, %v72, 0
  %v105 = vsel %vm100, %v73, 0
  %v108 = vsel %vm100, %v74, 0
  %v111 = vsel %vm100, %v75, 0
  %113 = vmatpush.bf16.msra.mxu0 0
  %114 = vmatpush.bf16.msra.mxu0 0
  %115 = vmatpush.bf16.msra.mxu0 0
  %116 = vmatpush.bf16.msra.mxu0 0
  %117 = vmatpush.bf16.msra.mxu0 %v95
  %118 = vmatpush.bf16.msra.mxu0 %v94
  %119 = vmatpush.bf16.msra.mxu0 %v93
  %120 = vmatpush.bf16.msra.mxu0 %v92
  %121 = vmatmul.bf16.gmra.mxu0 %v102
  %v122 = vpop.f32.mrf.mxu0
  %v123 = vadd.f32 %v54, %v122
  %v124 = vpop.f32.mrf.mxu0
  %v125 = vadd.f32 %v54, %v124
  %126 = vmatmul.bf16.gmra.mxu0 %v105
  %v127 = vpop.f32.mrf.mxu0
  %v128 = vadd.f32 %v54, %v127
  %v129 = vpop.f32.mrf.mxu0
  %v130 = vadd.f32 %v54, %v129
  %131 = vmatmul.bf16.gmra.mxu0 %v108
  %v132 = vpop.f32.mrf.mxu0
  %v133 = vadd.f32 %v54, %v132
  %v134 = vpop.f32.mrf.mxu0
  %v135 = vadd.f32 %v54, %v134
  %136 = vmatmul.bf16.gmra.mxu0 %v111
  %v137 = vpop.f32.mrf.mxu0
  %v138 = vadd.f32 %v54, %v137
  %v139 = vpop.f32.mrf.mxu0
  %v140 = vadd.f32 %v54, %v139
  %141 = vdwg.mxu0
  %v142 = vadd.f32 %v123, 0.0
  %v143 = vadd.f32 %v125, 0.0
  %vm144 = vcmp.ge.f32.partialorder %v142, 0.5
  %vm145 = vcmp.ge.f32.partialorder %v143, 0.5
  %v146 = vsel %vm144, 1, 0
  %v147 = vsel %vm145, 1, 0
  %v148 = vcvt.s32.f32 %v146
  %v149 = vcvt.s32.f32 %v147
  %v150 = vpack.c.bf16 %v148, %v148
  %v151 = vpack.c.bf16 %v149, %v149
  %vm152 = vcmask 257024
  %153 = vst.msk [vmem:[#allocation2] sm:$0xf] %vm152, %v150
  %154 = vst.msk [vmem:[#allocation2 + $0x4] sm:$0xf] %vm152, %v151
  %v155 = vsub.f32 1.0, %v148
  %v156 = vsub.f32 1.0, %v149
  %v157 = vmul.f32 %v142, %v155
  %v158 = vmul.f32 %v143, %v156
  %v159 = vmul.f32 %v157, 0.5
  %v160 = vmul.f32 %v158, 0.5
  %v161 = vadd.f32 %v159, %v128
  %v162 = vadd.f32 %v160, %v130
  %vm163 = vcmp.ge.f32.partialorder %v161, 0.5
  %vm164 = vcmp.ge.f32.partialorder %v162, 0.5
  %v165 = vsel %vm163, 1, 0
  %v166 = vsel %vm164, 1, 0
  %v167 = vcvt.s32.f32 %v165
  %v168 = vcvt.s32.f32 %v166
  %v169 = vpack.c.bf16 %v167, %v167
  %v170 = vpack.c.bf16 %v168, %v168
  %171 = vst.msk [vmem:[#allocation2 + $0x8] sm:$0xf] %vm152, %v169
  %172 = vst.msk [vmem:[#allocation2 + $0xc] sm:$0xf] %vm152, %v170
  %v173 = vsub.f32 1.0, %v167
  %v174 = vsub.f32 1.0, %v168
  %v175 = vmul.f32 %v161, %v173
  %v176 = vmul.f32 %v162, %v174
  %v177 = vmul.f32 %v175, 0.5
  %v178 = vmul.f32 %v176, 0.5
  %v179 = vadd.f32 %v177, %v133
  %v180 = vadd.f32 %v178, %v135
  %vm181 = vcmp.ge.f32.partialorder %v179, 0.5
  %vm182 = vcmp.ge.f32.partialorder %v180, 0.5
  %v183 = vsel %vm181, 1, 0
  %v184 = vsel %vm182, 1, 0
  %v185 = vcvt.s32.f32 %v183
  %v186 = vcvt.s32.f32 %v184
  %v187 = vpack.c.bf16 %v185, %v185
  %v188 = vpack.c.bf16 %v186, %v186
  %189 = vst.msk [vmem:[#allocation2 + $0x10] sm:$0xf] %vm152, %v187
  %190 = vst.msk [vmem:[#allocation2 + $0x14] sm:$0xf] %vm152, %v188
  %v191 = vsub.f32 1.0, %v185
  %v192 = vsub.f32 1.0, %v186
  %v193 = vmul.f32 %v179, %v191
  %v194 = vmul.f32 %v180, %v192
  %v195 = vmul.f32 %v193, 0.5
  %v196 = vmul.f32 %v194, 0.5
  %v197 = vadd.f32 %v195, %v138
  %v198 = vadd.f32 %v196, %v140
  %vm199 = vcmp.ge.f32.partialorder %v197, 0.5
  %vm200 = vcmp.ge.f32.partialorder %v198, 0.5
  %v201 = vsel %vm199, 1, 0
  %v202 = vsel %vm200, 1, 0
  %v203 = vcvt.s32.f32 %v201
  %v204 = vcvt.s32.f32 %v202
  %v205 = vpack.c.bf16 %v203, %v203
  %v206 = vpack.c.bf16 %v204, %v204
  %207 = vst.msk [vmem:[#allocation2 + $0x18] sm:$0xf] %vm152, %v205
  %208 = vst.msk [vmem:[#allocation2 + $0x1c] sm:$0xf] %vm152, %v206
  %v209 = vld [vmem:[%s0] sm:$0xf]
  %v210 = vld [vmem:[%s0 + $0x4] sm:$0xf]
  %v211 = vld [vmem:[%s0 + $0x8] sm:$0xf]
  %v212 = vld [vmem:[%s0 + $0xc] sm:$0xf]
  %v213 = vld [vmem:[%s0 + $0x10] sm:$0xf]
  %v214 = vld [vmem:[%s0 + $0x14] sm:$0xf]
  %v215 = vld [vmem:[%s0 + $0x18] sm:$0xf]
  %v216 = vld [vmem:[%s0 + $0x1c] sm:$0xf]
  %v217 = vld [vmem:[%s4] sm:$0xff]
  %v218 = vld [vmem:[%s4 + $0x8] sm:$0xff]
  %v219 = vld [vmem:[%s4 + $0x10] sm:$0xff]
  %v220 = vld [vmem:[%s4 + $0x18] sm:$0xff]
  %v221 = vld [vmem:[%s4 + $0x20] sm:$0xff]
  %v222 = vld [vmem:[%s4 + $0x28] sm:$0xff]
  %v223 = vld [vmem:[%s4 + $0x30] sm:$0xff]
  %v224 = vld [vmem:[%s4 + $0x38] sm:$0xff]
  %v233 = vunpack.c.l.b16 %v209
  %v234 = vunpack.c.l.b16 %v210
  %v235 = vunpack.c.l.b16 %v211
  %v236 = vunpack.c.l.b16 %v212
  %v237 = vunpack.c.l.b16 %v213
  %v238 = vunpack.c.l.b16 %v214
  %v239 = vunpack.c.l.b16 %v215
  %v240 = vunpack.c.l.b16 %v216
  %v241 = vpack.c.b16 %v234, %v233
  %v242 = vpack.c.b16 %v236, %v235
  %v243 = vpack.c.b16 %v238, %v237
  %v244 = vpack.c.b16 %v240, %v239
  %v253 = vunpack.c.l.b16 %v217
  %v254 = vunpack.c.h.b16 %v217
  %v255 = vunpack.c.l.b16 %v218
  %v256 = vunpack.c.h.b16 %v218
  %v257 = vunpack.c.l.b16 %v219
  %v258 = vunpack.c.h.b16 %v219
  %v259 = vunpack.c.l.b16 %v220
  %v260 = vunpack.c.h.b16 %v220
  %v261 = vunpack.c.l.b16 %v221
  %v262 = vunpack.c.h.b16 %v221
  %v263 = vunpack.c.l.b16 %v222
  %v264 = vunpack.c.h.b16 %v222
  %v265 = vunpack.c.l.b16 %v223
  %v266 = vunpack.c.h.b16 %v223
  %v267 = vunpack.c.l.b16 %v224
  %v268 = vunpack.c.h.b16 %v224
  %v269 = vpack.c.b16 %v257, %v253
  %v270 = vpack.c.b16 %v258, %v254
  %v271 = vpack.c.b16 %v259, %v255
  %v272 = vpack.c.b16 %v260, %v256
  %v273 = vpack.c.b16 %v265, %v261
  %v274 = vpack.c.b16 %v266, %v262
  %v275 = vpack.c.b16 %v267, %v263
  %v276 = vpack.c.b16 %v268, %v264
  %vm285 = vcmask 261120
  %v287 = vsel %vm285, %v241, 0
  %v290 = vsel %vm285, %v242, 0
  %v293 = vsel %vm285, %v243, 0
  %v296 = vsel %vm285, %v244, 0
  %298 = vmatpush.bf16.msra.mxu0 0
  %299 = vmatpush.bf16.msra.mxu0 0
  %300 = vmatpush.bf16.msra.mxu0 0
  %301 = vmatpush.bf16.msra.mxu0 0
  %302 = vmatpush.bf16.msra.mxu0 0
  %303 = vmatpush.bf16.msra.mxu0 0
  %304 = vmatpush.bf16.msra.mxu0 %v273
  %305 = vmatpush.bf16.msra.mxu0 %v269
  %306 = vmatmul.bf16.gmra.mxu0 %v287
  %v307 = vpop.f32.mrf.mxu0
  %v308 = vadd.f32 0.0, %v307
  %v309 = vpop.f32.mrf.mxu0
  %v310 = vadd.f32 0.0, %v309
  %311 = vmatmul.bf16.gmra.mxu0 %v290
  %v312 = vpop.f32.mrf.mxu0
  %v313 = vadd.f32 0.0, %v312
  %v314 = vpop.f32.mrf.mxu0
  %v315 = vadd.f32 0.0, %v314
  %316 = vmatmul.bf16.gmra.mxu0 %v293
  %v317 = vpop.f32.mrf.mxu0
  %v318 = vadd.f32 0.0, %v317
  %v319 = vpop.f32.mrf.mxu0
  %v320 = vadd.f32 0.0, %v319
  %321 = vmatmul.bf16.gmra.mxu0 %v296
  %v322 = vpop.f32.mrf.mxu0
  %v323 = vadd.f32 0.0, %v322
  %v324 = vpop.f32.mrf.mxu0
  %v325 = vadd.f32 0.0, %v324
  %326 = vdwg.mxu0
  %327 = vmatpush.bf16.msra.mxu0 0
  %328 = vmatpush.bf16.msra.mxu0 0
  %329 = vmatpush.bf16.msra.mxu0 0
  %330 = vmatpush.bf16.msra.mxu0 0
  %331 = vmatpush.bf16.msra.mxu0 0
  %332 = vmatpush.bf16.msra.mxu0 0
  %333 = vmatpush.bf16.msra.mxu0 %v274
  %334 = vmatpush.bf16.msra.mxu0 %v270
  %335 = vmatmul.bf16.gmra.mxu0 %v287
  %v336 = vpop.f32.mrf.mxu0
  %v337 = vadd.f32 0.0, %v336
  %v338 = vpop.f32.mrf.mxu0
  %v339 = vadd.f32 0.0, %v338
  %340 = vmatmul.bf16.gmra.mxu0 %v290
  %v341 = vpop.f32.mrf.mxu0
  %v342 = vadd.f32 0.0, %v341
  %v343 = vpop.f32.mrf.mxu0
  %v344 = vadd.f32 0.0, %v343
  %345 = vmatmul.bf16.gmra.mxu0 %v293
  %v346 = vpop.f32.mrf.mxu0
  %v347 = vadd.f32 0.0, %v346
  %v348 = vpop.f32.mrf.mxu0
  %v349 = vadd.f32 0.0, %v348
  %350 = vmatmul.bf16.gmra.mxu0 %v296
  %v351 = vpop.f32.mrf.mxu0
  %v352 = vadd.f32 0.0, %v351
  %v353 = vpop.f32.mrf.mxu0
  %v354 = vadd.f32 0.0, %v353
  %355 = vdwg.mxu0
  %356 = vmatpush.bf16.msra.mxu0 0
  %357 = vmatpush.bf16.msra.mxu0 0
  %358 = vmatpush.bf16.msra.mxu0 0
  %359 = vmatpush.bf16.msra.mxu0 0
  %360 = vmatpush.bf16.msra.mxu0 0
  %361 = vmatpush.bf16.msra.mxu0 0
  %362 = vmatpush.bf16.msra.mxu0 %v275
  %363 = vmatpush.bf16.msra.mxu0 %v271
  %364 = vmatmul.bf16.gmra.mxu0 %v287
  %v365 = vpop.f32.mrf.mxu0
  %v366 = vadd.f32 0.0, %v365
  %v367 = vpop.f32.mrf.mxu0
  %v368 = vadd.f32 0.0, %v367
  %369 = vmatmul.bf16.gmra.mxu0 %v290
  %v370 = vpop.f32.mrf.mxu0
  %v371 = vadd.f32 0.0, %v370
  %v372 = vpop.f32.mrf.mxu0
  %v373 = vadd.f32 0.0, %v372
  %374 = vmatmul.bf16.gmra.mxu0 %v293
  %v375 = vpop.f32.mrf.mxu0
  %v376 = vadd.f32 0.0, %v375
  %v377 = vpop.f32.mrf.mxu0
  %v378 = vadd.f32 0.0, %v377
  %379 = vmatmul.bf16.gmra.mxu0 %v296
  %v380 = vpop.f32.mrf.mxu0
  %v381 = vadd.f32 0.0, %v380
  %v382 = vpop.f32.mrf.mxu0
  %v383 = vadd.f32 0.0, %v382
  %384 = vdwg.mxu0
  %385 = vmatpush.bf16.msra.mxu0 0
  %386 = vmatpush.bf16.msra.mxu0 0
  %387 = vmatpush.bf16.msra.mxu0 0
  %388 = vmatpush.bf16.msra.mxu0 0
  %389 = vmatpush.bf16.msra.mxu0 0
  %390 = vmatpush.bf16.msra.mxu0 0
  %391 = vmatpush.bf16.msra.mxu0 %v276
  %392 = vmatpush.bf16.msra.mxu0 %v272
  %393 = vmatmul.bf16.gmra.mxu0 %v287
  %v394 = vpop.f32.mrf.mxu0
  %v395 = vadd.f32 0.0, %v394
  %v396 = vpop.f32.mrf.mxu0
  %v397 = vadd.f32 0.0, %v396
  %398 = vmatmul.bf16.gmra.mxu0 %v290
  %v399 = vpop.f32.mrf.mxu0
  %v400 = vadd.f32 0.0, %v399
  %v401 = vpop.f32.mrf.mxu0
  %v402 = vadd.f32 0.0, %v401
  %403 = vmatmul.bf16.gmra.mxu0 %v293
  %v404 = vpop.f32.mrf.mxu0
  %v405 = vadd.f32 0.0, %v404
  %v406 = vpop.f32.mrf.mxu0
  %v407 = vadd.f32 0.0, %v406
  %408 = vmatmul.bf16.gmra.mxu0 %v296
  %v409 = vpop.f32.mrf.mxu0
  %v410 = vadd.f32 0.0, %v409
  %v411 = vpop.f32.mrf.mxu0
  %v412 = vadd.f32 0.0, %v411
  %413 = vdwg.mxu0
  %414 = vst [vmem:[#allocation3] sm:$0xff] %v308
  %415 = vst [vmem:[#allocation3 + $0x8] sm:$0xff] %v337
  %416 = vst [vmem:[#allocation3 + $0x10] sm:$0xff] %v366
  %417 = vst [vmem:[#allocation3 + $0x18] sm:$0xff] %v395
  %418 = vst [vmem:[#allocation3 + $0x20] sm:$0xff] %v310
  %419 = vst [vmem:[#allocation3 + $0x28] sm:$0xff] %v339
  %420 = vst [vmem:[#allocation3 + $0x30] sm:$0xff] %v368
  %421 = vst [vmem:[#allocation3 + $0x38] sm:$0xff] %v397
  %422 = vst [vmem:[#allocation3 + $0x40] sm:$0xff] %v313
  %423 = vst [vmem:[#allocation3 + $0x48] sm:$0xff] %v342
  %424 = vst [vmem:[#allocation3 + $0x50] sm:$0xff] %v371
  %425 = vst [vmem:[#allocation3 + $0x58] sm:$0xff] %v400
  %426 = vst [vmem:[#allocation3 + $0x60] sm:$0xff] %v315
  %427 = vst [vmem:[#allocation3 + $0x68] sm:$0xff] %v344
  %428 = vst [vmem:[#allocation3 + $0x70] sm:$0xff] %v373
  %429 = vst [vmem:[#allocation3 + $0x78] sm:$0xff] %v402
  %430 = vst [vmem:[#allocation3 + $0x80] sm:$0xff] %v318
  %431 = vst [vmem:[#allocation3 + $0x88] sm:$0xff] %v347
  %432 = vst [vmem:[#allocation3 + $0x90] sm:$0xff] %v376
  %433 = vst [vmem:[#allocation3 + $0x98] sm:$0xff] %v405
  %434 = vst [vmem:[#allocation3 + $0xa0] sm:$0xff] %v320
  %435 = vst [vmem:[#allocation3 + $0xa8] sm:$0xff] %v349
  %436 = vst [vmem:[#allocation3 + $0xb0] sm:$0xff] %v378
  %437 = vst [vmem:[#allocation3 + $0xb8] sm:$0xff] %v407
  %438 = vst [vmem:[#allocation3 + $0xc0] sm:$0xff] %v323
  %439 = vst [vmem:[#allocation3 + $0xc8] sm:$0xff] %v352
  %440 = vst [vmem:[#allocation3 + $0xd0] sm:$0xff] %v381
  %441 = vst [vmem:[#allocation3 + $0xd8] sm:$0xff] %v410
  %442 = vst [vmem:[#allocation3 + $0xe0] sm:$0xff] %v325
  %443 = vst [vmem:[#allocation3 + $0xe8] sm:$0xff] %v354
  %444 = vst [vmem:[#allocation3 + $0xf0] sm:$0xff] %v383
  %445 = vst [vmem:[#allocation3 + $0xf8] sm:$0xff] %v412
  %v446 = vld [vmem:[#allocation3] sm:$0xff]
  %v447 = vld [vmem:[#allocation3 + $0x8] sm:$0xff]
  %v448 = vld [vmem:[#allocation3 + $0x10] sm:$0xff]
  %v449 = vld [vmem:[#allocation3 + $0x18] sm:$0xff]
  %v450 = vld [vmem:[#allocation3 + $0x20] sm:$0xff]
  %v451 = vld [vmem:[#allocation3 + $0x28] sm:$0xff]
  %v452 = vld [vmem:[#allocation3 + $0x30] sm:$0xff]
  %v453 = vld [vmem:[#allocation3 + $0x38] sm:$0xff]
  %v454 = vld [vmem:[#allocation3 + $0x40] sm:$0xff]
  %v455 = vld [vmem:[#allocation3 + $0x48] sm:$0xff]
  %v456 = vld [vmem:[#allocation3 + $0x50] sm:$0xff]
  %v457 = vld [vmem:[#allocation3 + $0x58] sm:$0xff]
  %v458 = vld [vmem:[#allocation3 + $0x60] sm:$0xff]
  %v459 = vld [vmem:[#allocation3 + $0x68] sm:$0xff]
  %v460 = vld [vmem:[#allocation3 + $0x70] sm:$0xff]
  %v461 = vld [vmem:[#allocation3 + $0x78] sm:$0xff]
  %v462 = vld [vmem:[#allocation3 + $0x80] sm:$0xff]
  %v463 = vld [vmem:[#allocation3 + $0x88] sm:$0xff]
  %v464 = vld [vmem:[#allocation3 + $0x90] sm:$0xff]
  %v465 = vld [vmem:[#allocation3 + $0x98] sm:$0xff]
  %v466 = vld [vmem:[#allocation3 + $0xa0] sm:$0xff]
  %v467 = vld [vmem:[#allocation3 + $0xa8] sm:$0xff]
  %v468 = vld [vmem:[#allocation3 + $0xb0] sm:$0xff]
  %v469 = vld [vmem:[#allocation3 + $0xb8] sm:$0xff]
  %v470 = vld [vmem:[#allocation3 + $0xc0] sm:$0xff]
  %v471 = vld [vmem:[#allocation3 + $0xc8] sm:$0xff]
  %v472 = vld [vmem:[#allocation3 + $0xd0] sm:$0xff]
  %v473 = vld [vmem:[#allocation3 + $0xd8] sm:$0xff]
  %v474 = vld [vmem:[#allocation3 + $0xe0] sm:$0xff]
  %v475 = vld [vmem:[#allocation3 + $0xe8] sm:$0xff]
  %v476 = vld [vmem:[#allocation3 + $0xf0] sm:$0xff]
  %v477 = vld [vmem:[#allocation3 + $0xf8] sm:$0xff]
  %v478 = vld [vmem:[#allocation2] sm:$0xf]
  %v479 = vld [vmem:[#allocation2 + $0x4] sm:$0xf]
  %v480 = vld [vmem:[#allocation2 + $0x8] sm:$0xf]
  %v481 = vld [vmem:[#allocation2 + $0xc] sm:$0xf]
  %v482 = vld [vmem:[#allocation2 + $0x10] sm:$0xf]
  %v483 = vld [vmem:[#allocation2 + $0x14] sm:$0xf]
  %v484 = vld [vmem:[#allocation2 + $0x18] sm:$0xf]
  %v485 = vld [vmem:[#allocation2 + $0x1c] sm:$0xf]
  %v486 = vld [vmem:[%s5] sm:$0xff]
  %v487 = vld [vmem:[%s5 + $0x8] sm:$0xff]
  %v488 = vld [vmem:[%s5 + $0x10] sm:$0xff]
  %v489 = vld [vmem:[%s5 + $0x18] sm:$0xff]
  %v490 = vld [vmem:[%s5 + $0x20] sm:$0xff]
  %v491 = vld [vmem:[%s5 + $0x28] sm:$0xff]
  %v492 = vld [vmem:[%s5 + $0x30] sm:$0xff]
  %v493 = vld [vmem:[%s5 + $0x38] sm:$0xff]
  %v502 = vunpack.c.l.b16 %v478
  %v503 = vunpack.c.l.b16 %v479
  %v504 = vunpack.c.l.b16 %v480
  %v505 = vunpack.c.l.b16 %v481
  %v506 = vunpack.c.l.b16 %v482
  %v507 = vunpack.c.l.b16 %v483
  %v508 = vunpack.c.l.b16 %v484
  %v509 = vunpack.c.l.b16 %v485
  %v510 = vpack.c.b16 %v503, %v502
  %v511 = vpack.c.b16 %v505, %v504
  %v512 = vpack.c.b16 %v507, %v506
  %v513 = vpack.c.b16 %v509, %v508
  %v522 = vunpack.c.l.b16 %v486
  %v523 = vunpack.c.h.b16 %v486
  %v524 = vunpack.c.l.b16 %v487
  %v525 = vunpack.c.h.b16 %v487
  %v526 = vunpack.c.l.b16 %v488
  %v527 = vunpack.c.h.b16 %v488
  %v528 = vunpack.c.l.b16 %v489
  %v529 = vunpack.c.h.b16 %v489
  %v530 = vunpack.c.l.b16 %v490
  %v531 = vunpack.c.h.b16 %v490
  %v532 = vunpack.c.l.b16 %v491
  %v533 = vunpack.c.h.b16 %v491
  %v534 = vunpack.c.l.b16 %v492
  %v535 = vunpack.c.h.b16 %v492
  %v536 = vunpack.c.l.b16 %v493
  %v537 = vunpack.c.h.b16 %v493
  %v538 = vpack.c.b16 %v526, %v522
  %v539 = vpack.c.b16 %v527, %v523
  %v540 = vpack.c.b16 %v528, %v524
  %v541 = vpack.c.b16 %v529, %v525
  %v542 = vpack.c.b16 %v534, %v530
  %v543 = vpack.c.b16 %v535, %v531
  %v544 = vpack.c.b16 %v536, %v532
  %v545 = vpack.c.b16 %v537, %v533
  %v555 = vsel %vm285, %v510, 0
  %v558 = vsel %vm285, %v511, 0
  %v561 = vsel %vm285, %v512, 0
  %v564 = vsel %vm285, %v513, 0
  %566 = vmatpush.bf16.msra.mxu0 0
  %567 = vmatpush.bf16.msra.mxu0 0
  %568 = vmatpush.bf16.msra.mxu0 0
  %569 = vmatpush.bf16.msra.mxu0 0
  %570 = vmatpush.bf16.msra.mxu0 0
  %571 = vmatpush.bf16.msra.mxu0 0
  %572 = vmatpush.bf16.msra.mxu0 %v542
  %573 = vmatpush.bf16.msra.mxu0 %v538
  %574 = vmatmul.bf16.gmra.mxu0 %v555
  %v575 = vpop.f32.mrf.mxu0
  %v576 = vadd.f32 0.0, %v575
  %v577 = vpop.f32.mrf.mxu0
  %v578 = vadd.f32 0.0, %v577
  %579 = vmatmul.bf16.gmra.mxu0 %v558
  %v580 = vpop.f32.mrf.mxu0
  %v581 = vadd.f32 0.0, %v580
  %v582 = vpop.f32.mrf.mxu0
  %v583 = vadd.f32 0.0, %v582
  %584 = vmatmul.bf16.gmra.mxu0 %v561
  %v585 = vpop.f32.mrf.mxu0
  %v586 = vadd.f32 0.0, %v585
  %v587 = vpop.f32.mrf.mxu0
  %v588 = vadd.f32 0.0, %v587
  %589 = vmatmul.bf16.gmra.mxu0 %v564
  %v590 = vpop.f32.mrf.mxu0
  %v591 = vadd.f32 0.0, %v590
  %v592 = vpop.f32.mrf.mxu0
  %v593 = vadd.f32 0.0, %v592
  %594 = vdwg.mxu0
  %595 = vmatpush.bf16.msra.mxu0 0
  %596 = vmatpush.bf16.msra.mxu0 0
  %597 = vmatpush.bf16.msra.mxu0 0
  %598 = vmatpush.bf16.msra.mxu0 0
  %599 = vmatpush.bf16.msra.mxu0 0
  %600 = vmatpush.bf16.msra.mxu0 0
  %601 = vmatpush.bf16.msra.mxu0 %v543
  %602 = vmatpush.bf16.msra.mxu0 %v539
  %603 = vmatmul.bf16.gmra.mxu0 %v555
  %v604 = vpop.f32.mrf.mxu0
  %v605 = vadd.f32 0.0, %v604
  %v606 = vpop.f32.mrf.mxu0
  %v607 = vadd.f32 0.0, %v606
  %608 = vmatmul.bf16.gmra.mxu0 %v558
  %v609 = vpop.f32.mrf.mxu0
  %v610 = vadd.f32 0.0, %v609
  %v611 = vpop.f32.mrf.mxu0
  %v612 = vadd.f32 0.0, %v611
  %613 = vmatmul.bf16.gmra.mxu0 %v561
  %v614 = vpop.f32.mrf.mxu0
  %v615 = vadd.f32 0.0, %v614
  %v616 = vpop.f32.mrf.mxu0
  %v617 = vadd.f32 0.0, %v616
  %618 = vmatmul.bf16.gmra.mxu0 %v564
  %v619 = vpop.f32.mrf.mxu0
  %v620 = vadd.f32 0.0, %v619
  %v621 = vpop.f32.mrf.mxu0
  %v622 = vadd.f32 0.0, %v621
  %623 = vdwg.mxu0
  %624 = vmatpush.bf16.msra.mxu0 0
  %625 = vmatpush.bf16.msra.mxu0 0
  %626 = vmatpush.bf16.msra.mxu0 0
  %627 = vmatpush.bf16.msra.mxu0 0
  %628 = vmatpush.bf16.msra.mxu0 0
  %629 = vmatpush.bf16.msra.mxu0 0
  %630 = vmatpush.bf16.msra.mxu0 %v544
  %631 = vmatpush.bf16.msra.mxu0 %v540
  %632 = vmatmul.bf16.gmra.mxu0 %v555
  %v633 = vpop.f32.mrf.mxu0
  %v634 = vadd.f32 0.0, %v633
  %v635 = vpop.f32.mrf.mxu0
  %v636 = vadd.f32 0.0, %v635
  %637 = vmatmul.bf16.gmra.mxu0 %v558
  %v638 = vpop.f32.mrf.mxu0
  %v639 = vadd.f32 0.0, %v638
  %v640 = vpop.f32.mrf.mxu0
  %v641 = vadd.f32 0.0, %v640
  %642 = vmatmul.bf16.gmra.mxu0 %v561
  %v643 = vpop.f32.mrf.mxu0
  %v644 = vadd.f32 0.0, %v643
  %v645 = vpop.f32.mrf.mxu0
  %v646 = vadd.f32 0.0, %v645
  %647 = vmatmul.bf16.gmra.mxu0 %v564
  %v648 = vpop.f32.mrf.mxu0
  %v649 = vadd.f32 0.0, %v648
  %v650 = vpop.f32.mrf.mxu0
  %v651 = vadd.f32 0.0, %v650
  %652 = vdwg.mxu0
  %653 = vmatpush.bf16.msra.mxu0 0
  %654 = vmatpush.bf16.msra.mxu0 0
  %655 = vmatpush.bf16.msra.mxu0 0
  %656 = vmatpush.bf16.msra.mxu0 0
  %657 = vmatpush.bf16.msra.mxu0 0
  %658 = vmatpush.bf16.msra.mxu0 0
  %659 = vmatpush.bf16.msra.mxu0 %v545
  %660 = vmatpush.bf16.msra.mxu0 %v541
  %661 = vmatmul.bf16.gmra.mxu0 %v555
  %v662 = vpop.f32.mrf.mxu0
  %v663 = vadd.f32 0.0, %v662
  %v664 = vpop.f32.mrf.mxu0
  %v665 = vadd.f32 0.0, %v664
  %666 = vmatmul.bf16.gmra.mxu0 %v558
  %v667 = vpop.f32.mrf.mxu0
  %v668 = vadd.f32 0.0, %v667
  %v669 = vpop.f32.mrf.mxu0
  %v670 = vadd.f32 0.0, %v669
  %671 = vmatmul.bf16.gmra.mxu0 %v561
  %v672 = vpop.f32.mrf.mxu0
  %v673 = vadd.f32 0.0, %v672
  %v674 = vpop.f32.mrf.mxu0
  %v675 = vadd.f32 0.0, %v674
  %676 = vmatmul.bf16.gmra.mxu0 %v564
  %v677 = vpop.f32.mrf.mxu0
  %v678 = vadd.f32 0.0, %v677
  %v679 = vpop.f32.mrf.mxu0
  %v680 = vadd.f32 0.0, %v679
  %681 = vdwg.mxu0
  %v682 = vadd.f32 %v446, %v576
  %v683 = vadd.f32 %v447, %v605
  %v684 = vadd.f32 %v448, %v634
  %v685 = vadd.f32 %v449, %v663
  %v686 = vadd.f32 %v450, %v578
  %v687 = vadd.f32 %v451, %v607
  %v688 = vadd.f32 %v452, %v636
  %v689 = vadd.f32 %v453, %v665
  %v690 = vadd.f32 %v454, %v581
  %v691 = vadd.f32 %v455, %v610
  %v692 = vadd.f32 %v456, %v639
  %v693 = vadd.f32 %v457, %v668
  %v694 = vadd.f32 %v458, %v583
  %v695 = vadd.f32 %v459, %v612
  %v696 = vadd.f32 %v460, %v641
  %v697 = vadd.f32 %v461, %v670
  %v698 = vadd.f32 %v462, %v586
  %v699 = vadd.f32 %v463, %v615
  %v700 = vadd.f32 %v464, %v644
  %v701 = vadd.f32 %v465, %v673
  %v702 = vadd.f32 %v466, %v588
  %v703 = vadd.f32 %v467, %v617
  %v704 = vadd.f32 %v468, %v646
  %v705 = vadd.f32 %v469, %v675
  %v706 = vadd.f32 %v470, %v591
  %v707 = vadd.f32 %v471, %v620
  %v708 = vadd.f32 %v472, %v649
  %v709 = vadd.f32 %v473, %v678
  %v710 = vadd.f32 %v474, %v593
  %v711 = vadd.f32 %v475, %v622
  %v712 = vadd.f32 %v476, %v651
  %v713 = vadd.f32 %v477, %v680
  %714 = vst [vmem:[#allocation3] sm:$0xff] %v682
  %715 = vst [vmem:[#allocation3 + $0x8] sm:$0xff] %v683
  %716 = vst [vmem:[#allocation3 + $0x10] sm:$0xff] %v684
  %717 = vst [vmem:[#allocation3 + $0x18] sm:$0xff] %v685
  %718 = vst [vmem:[#allocation3 + $0x20] sm:$0xff] %v686
  %719 = vst [vmem:[#allocation3 + $0x28] sm:$0xff] %v687
  %720 = vst [vmem:[#allocation3 + $0x30] sm:$0xff] %v688
  %721 = vst [vmem:[#allocation3 + $0x38] sm:$0xff] %v689
  %722 = vst [vmem:[#allocation3 + $0x40] sm:$0xff] %v690
  %723 = vst [vmem:[#allocation3 + $0x48] sm:$0xff] %v691
  %724 = vst [vmem:[#allocation3 + $0x50] sm:$0xff] %v692
  %725 = vst [vmem:[#allocation3 + $0x58] sm:$0xff] %v693
  %726 = vst [vmem:[#allocation3 + $0x60] sm:$0xff] %v694
  %727 = vst [vmem:[#allocation3 + $0x68] sm:$0xff] %v695
  %728 = vst [vmem:[#allocation3 + $0x70] sm:$0xff] %v696
  %729 = vst [vmem:[#allocation3 + $0x78] sm:$0xff] %v697
  %730 = vst [vmem:[#allocation3 + $0x80] sm:$0xff] %v698
  %731 = vst [vmem:[#allocation3 + $0x88] sm:$0xff] %v699
  %732 = vst [vmem:[#allocation3 + $0x90] sm:$0xff] %v700
  %733 = vst [vmem:[#allocation3 + $0x98] sm:$0xff] %v701
  %734 = vst [vmem:[#allocation3 + $0xa0] sm:$0xff] %v702
  %735 = vst [vmem:[#allocation3 + $0xa8] sm:$0xff] %v703
  %736 = vst [vmem:[#allocation3 + $0xb0] sm:$0xff] %v704
  %737 = vst [vmem:[#allocation3 + $0xb8] sm:$0xff] %v705
  %738 = vst [vmem:[#allocation3 + $0xc0] sm:$0xff] %v706
  %739 = vst [vmem:[#allocation3 + $0xc8] sm:$0xff] %v707
  %740 = vst [vmem:[#allocation3 + $0xd0] sm:$0xff] %v708
  %741 = vst [vmem:[#allocation3 + $0xd8] sm:$0xff] %v709
  %742 = vst [vmem:[#allocation3 + $0xe0] sm:$0xff] %v710
  %743 = vst [vmem:[#allocation3 + $0xe8] sm:$0xff] %v711
  %744 = vst [vmem:[#allocation3 + $0xf0] sm:$0xff] %v712
  %745 = vst [vmem:[#allocation3 + $0xf8] sm:$0xff] %v713
  %v746 = vld [vmem:[#allocation3] sm:$0xff]
  %v747 = vld [vmem:[#allocation3 + $0x8] sm:$0xff]
  %v748 = vld [vmem:[#allocation3 + $0x10] sm:$0xff]
  %v749 = vld [vmem:[#allocation3 + $0x18] sm:$0xff]
  %v750 = vld [vmem:[#allocation3 + $0x20] sm:$0xff]
  %v751 = vld [vmem:[#allocation3 + $0x28] sm:$0xff]
  %v752 = vld [vmem:[#allocation3 + $0x30] sm:$0xff]
  %v753 = vld [vmem:[#allocation3 + $0x38] sm:$0xff]
  %v754 = vadd.f32 %v746, 0.0
  %v755 = vadd.f32 %v747, 0.0
  %v756 = vadd.f32 %v748, 0.0
  %v757 = vadd.f32 %v749, 0.0
  %v758 = vadd.f32 %v750, 0.0
  %v759 = vadd.f32 %v751, 0.0
  %v760 = vadd.f32 %v752, 0.0
  %v761 = vadd.f32 %v753, 0.0
  %vm762 = vcmp.ge.f32.partialorder %v754, 0.5
  %vm763 = vcmp.ge.f32.partialorder %v755, 0.5
  %vm764 = vcmp.ge.f32.partialorder %v756, 0.5
  %vm765 = vcmp.ge.f32.partialorder %v757, 0.5
  %vm766 = vcmp.ge.f32.partialorder %v758, 0.5
  %vm767 = vcmp.ge.f32.partialorder %v759, 0.5
  %vm768 = vcmp.ge.f32.partialorder %v760, 0.5
  %vm769 = vcmp.ge.f32.partialorder %v761, 0.5
  %v770 = vsel %vm762, 1, 0
  %v771 = vsel %vm763, 1, 0
  %v772 = vsel %vm764, 1, 0
  %v773 = vsel %vm765, 1, 0
  %v774 = vsel %vm766, 1, 0
  %v775 = vsel %vm767, 1, 0
  %v776 = vsel %vm768, 1, 0
  %v777 = vsel %vm769, 1, 0
  %v778 = vcvt.s32.f32 %v770
  %v779 = vcvt.s32.f32 %v771
  %v780 = vcvt.s32.f32 %v772
  %v781 = vcvt.s32.f32 %v773
  %v782 = vcvt.s32.f32 %v774
  %v783 = vcvt.s32.f32 %v775
  %v784 = vcvt.s32.f32 %v776
  %v785 = vcvt.s32.f32 %v777
  %v786 = vpack.c.bf16 %v779, %v778
  %v787 = vpack.c.bf16 %v781, %v780
  %v788 = vpack.c.bf16 %v783, %v782
  %v789 = vpack.c.bf16 %v785, %v784
  %790 = vst [vmem:[#allocation4] sm:$0xff] %v786
  %791 = vst [vmem:[#allocation4 + $0x8] sm:$0xff] %v787
  %792 = vst [vmem:[#allocation4 + $0x10] sm:$0xff] %v788
  %793 = vst [vmem:[#allocation4 + $0x18] sm:$0xff] %v789
  %v794 = vsub.f32 1.0, %v778
  %v795 = vsub.f32 1.0, %v779
  %v796 = vsub.f32 1.0, %v780
  %v797 = vsub.f32 1.0, %v781
  %v798 = vsub.f32 1.0, %v782
  %v799 = vsub.f32 1.0, %v783
  %v800 = vsub.f32 1.0, %v784
  %v801 = vsub.f32 1.0, %v785
  %v802 = vmul.f32 %v754, %v794
  %v803 = vmul.f32 %v755, %v795
  %v804 = vmul.f32 %v756, %v796
  %v805 = vmul.f32 %v757, %v797
  %v806 = vmul.f32 %v758, %v798
  %v807 = vmul.f32 %v759, %v799
  %v808 = vmul.f32 %v760, %v800
  %v809 = vmul.f32 %v761, %v801
  %v810 = vmul.f32 %v802, 0.5
  %v811 = vmul.f32 %v803, 0.5
  %v812 = vmul.f32 %v804, 0.5
  %v813 = vmul.f32 %v805, 0.5
  %v814 = vmul.f32 %v806, 0.5
  %v815 = vmul.f32 %v807, 0.5
  %v816 = vmul.f32 %v808, 0.5
  %v817 = vmul.f32 %v809, 0.5
  %v818 = vld [vmem:[#allocation3 + $0x40] sm:$0xff]
  %v819 = vld [vmem:[#allocation3 + $0x48] sm:$0xff]
  %v820 = vld [vmem:[#allocation3 + $0x50] sm:$0xff]
  %v821 = vld [vmem:[#allocation3 + $0x58] sm:$0xff]
  %v822 = vld [vmem:[#allocation3 + $0x60] sm:$0xff]
  %v823 = vld [vmem:[#allocation3 + $0x68] sm:$0xff]
  %v824 = vld [vmem:[#allocation3 + $0x70] sm:$0xff]
  %v825 = vld [vmem:[#allocation3 + $0x78] sm:$0xff]
  %v826 = vadd.f32 %v810, %v818
  %v827 = vadd.f32 %v811, %v819
  %v828 = vadd.f32 %v812, %v820
  %v829 = vadd.f32 %v813, %v821
  %v830 = vadd.f32 %v814, %v822
  %v831 = vadd.f32 %v815, %v823
  %v832 = vadd.f32 %v816, %v824
  %v833 = vadd.f32 %v817, %v825
  %vm834 = vcmp.ge.f32.partialorder %v826, 0.5
  %vm835 = vcmp.ge.f32.partialorder %v827, 0.5
  %vm836 = vcmp.ge.f32.partialorder %v828, 0.5
  %vm837 = vcmp.ge.f32.partialorder %v829, 0.5
  %vm838 = vcmp.ge.f32.partialorder %v830, 0.5
  %vm839 = vcmp.ge.f32.partialorder %v831, 0.5
  %vm840 = vcmp.ge.f32.partialorder %v832, 0.5
  %vm841 = vcmp.ge.f32.partialorder %v833, 0.5
  %v842 = vsel %vm834, 1, 0
  %v843 = vsel %vm835, 1, 0
  %v844 = vsel %vm836, 1, 0
  %v845 = vsel %vm837, 1, 0
  %v846 = vsel %vm838, 1, 0
  %v847 = vsel %vm839, 1, 0
  %v848 = vsel %vm840, 1, 0
  %v849 = vsel %vm841, 1, 0
  %v850 = vcvt.s32.f32 %v842
  %v851 = vcvt.s32.f32 %v843
  %v852 = vcvt.s32.f32 %v844
  %v853 = vcvt.s32.f32 %v845
  %v854 = vcvt.s32.f32 %v846
  %v855 = vcvt.s32.f32 %v847
  %v856 = vcvt.s32.f32 %v848
  %v857 = vcvt.s32.f32 %v849
  %v858 = vpack.c.bf16 %v851, %v850
  %v859 = vpack.c.bf16 %v853, %v852
  %v860 = vpack.c.bf16 %v855, %v854
  %v861 = vpack.c.bf16 %v857, %v856
  %862 = vst [vmem:[#allocation4 + $0x20] sm:$0xff] %v858
  %863 = vst [vmem:[#allocation4 + $0x28] sm:$0xff] %v859
  %864 = vst [vmem:[#allocation4 + $0x30] sm:$0xff] %v860
  %865 = vst [vmem:[#allocation4 + $0x38] sm:$0xff] %v861
  %v866 = vsub.f32 1.0, %v850
  %v867 = vsub.f32 1.0, %v851
  %v868 = vsub.f32 1.0, %v852
  %v869 = vsub.f32 1.0, %v853
  %v870 = vsub.f32 1.0, %v854
  %v871 = vsub.f32 1.0, %v855
  %v872 = vsub.f32 1.0, %v856
  %v873 = vsub.f32 1.0, %v857
  %v874 = vmul.f32 %v826, %v866
  %v875 = vmul.f32 %v827, %v867
  %v876 = vmul.f32 %v828, %v868
  %v877 = vmul.f32 %v829, %v869
  %v878 = vmul.f32 %v830, %v870
  %v879 = vmul.f32 %v831, %v871
  %v880 = vmul.f32 %v832, %v872
  %v881 = vmul.f32 %v833, %v873
  %v882 = vmul.f32 %v874, 0.5
  %v883 = vmul.f32 %v875, 0.5
  %v884 = vmul.f32 %v876, 0.5
  %v885 = vmul.f32 %v877, 0.5
  %v886 = vmul.f32 %v878, 0.5
  %v887 = vmul.f32 %v879, 0.5
  %v888 = vmul.f32 %v880, 0.5
  %v889 = vmul.f32 %v881, 0.5
  %v890 = vld [vmem:[#allocation3 + $0x80] sm:$0xff]
  %v891 = vld [vmem:[#allocation3 + $0x88] sm:$0xff]
  %v892 = vld [vmem:[#allocation3 + $0x90] sm:$0xff]
  %v893 = vld [vmem:[#allocation3 + $0x98] sm:$0xff]
  %v894 = vld [vmem:[#allocation3 + $0xa0] sm:$0xff]
  %v895 = vld [vmem:[#allocation3 + $0xa8] sm:$0xff]
  %v896 = vld [vmem:[#allocation3 + $0xb0] sm:$0xff]
  %v897 = vld [vmem:[#allocation3 + $0xb8] sm:$0xff]
  %v898 = vadd.f32 %v882, %v890
  %v899 = vadd.f32 %v883, %v891
  %v900 = vadd.f32 %v884, %v892
  %v901 = vadd.f32 %v885, %v893
  %v902 = vadd.f32 %v886, %v894
  %v903 = vadd.f32 %v887, %v895
  %v904 = vadd.f32 %v888, %v896
  %v905 = vadd.f32 %v889, %v897
  %vm906 = vcmp.ge.f32.partialorder %v898, 0.5
  %vm907 = vcmp.ge.f32.partialorder %v899, 0.5
  %vm908 = vcmp.ge.f32.partialorder %v900, 0.5
  %vm909 = vcmp.ge.f32.partialorder %v901, 0.5
  %vm910 = vcmp.ge.f32.partialorder %v902, 0.5
  %vm911 = vcmp.ge.f32.partialorder %v903, 0.5
  %vm912 = vcmp.ge.f32.partialorder %v904, 0.5
  %vm913 = vcmp.ge.f32.partialorder %v905, 0.5
  %v914 = vsel %vm906, 1, 0
  %v915 = vsel %vm907, 1, 0
  %v916 = vsel %vm908, 1, 0
  %v917 = vsel %vm909, 1, 0
  %v918 = vsel %vm910, 1, 0
  %v919 = vsel %vm911, 1, 0
  %v920 = vsel %vm912, 1, 0
  %v921 = vsel %vm913, 1, 0
  %v922 = vcvt.s32.f32 %v914
  %v923 = vcvt.s32.f32 %v915
  %v924 = vcvt.s32.f32 %v916
  %v925 = vcvt.s32.f32 %v917
  %v926 = vcvt.s32.f32 %v918
  %v927 = vcvt.s32.f32 %v919
  %v928 = vcvt.s32.f32 %v920
  %v929 = vcvt.s32.f32 %v921
  %v930 = vpack.c.bf16 %v923, %v922
  %v931 = vpack.c.bf16 %v925, %v924
  %v932 = vpack.c.bf16 %v927, %v926
  %v933 = vpack.c.bf16 %v929, %v928
  %934 = vst [vmem:[#allocation4 + $0x40] sm:$0xff] %v930
  %935 = vst [vmem:[#allocation4 + $0x48] sm:$0xff] %v931
  %936 = vst [vmem:[#allocation4 + $0x50] sm:$0xff] %v932
  %937 = vst [vmem:[#allocation4 + $0x58] sm:$0xff] %v933
  %v938 = vsub.f32 1.0, %v922
  %v939 = vsub.f32 1.0, %v923
  %v940 = vsub.f32 1.0, %v924
  %v941 = vsub.f32 1.0, %v925
  %v942 = vsub.f32 1.0, %v926
  %v943 = vsub.f32 1.0, %v927
  %v944 = vsub.f32 1.0, %v928
  %v945 = vsub.f32 1.0, %v929
  %v946 = vmul.f32 %v898, %v938
  %v947 = vmul.f32 %v899, %v939
  %v948 = vmul.f32 %v900, %v940
  %v949 = vmul.f32 %v901, %v941
  %v950 = vmul.f32 %v902, %v942
  %v951 = vmul.f32 %v903, %v943
  %v952 = vmul.f32 %v904, %v944
  %v953 = vmul.f32 %v905, %v945
  %v954 = vmul.f32 %v946, 0.5
  %v955 = vmul.f32 %v947, 0.5
  %v956 = vmul.f32 %v948, 0.5
  %v957 = vmul.f32 %v949, 0.5
  %v958 = vmul.f32 %v950, 0.5
  %v959 = vmul.f32 %v951, 0.5
  %v960 = vmul.f32 %v952, 0.5
  %v961 = vmul.f32 %v953, 0.5
  %v962 = vld [vmem:[#allocation3 + $0xc0] sm:$0xff]
  %v963 = vld [vmem:[#allocation3 + $0xc8] sm:$0xff]
  %v964 = vld [vmem:[#allocation3 + $0xd0] sm:$0xff]
  %v965 = vld [vmem:[#allocation3 + $0xd8] sm:$0xff]
  %v966 = vld [vmem:[#allocation3 + $0xe0] sm:$0xff]
  %v967 = vld [vmem:[#allocation3 + $0xe8] sm:$0xff]
  %v968 = vld [vmem:[#allocation3 + $0xf0] sm:$0xff]
  %v969 = vld [vmem:[#allocation3 + $0xf8] sm:$0xff]
  %v970 = vadd.f32 %v954, %v962
  %v971 = vadd.f32 %v955, %v963
  %v972 = vadd.f32 %v956, %v964
  %v973 = vadd.f32 %v957, %v965
  %v974 = vadd.f32 %v958, %v966
  %v975 = vadd.f32 %v959, %v967
  %v976 = vadd.f32 %v960, %v968
  %v977 = vadd.f32 %v961, %v969
  %vm978 = vcmp.ge.f32.partialorder %v970, 0.5
  %vm979 = vcmp.ge.f32.partialorder %v971, 0.5
  %vm980 = vcmp.ge.f32.partialorder %v972, 0.5
  %vm981 = vcmp.ge.f32.partialorder %v973, 0.5
  %vm982 = vcmp.ge.f32.partialorder %v974, 0.5
  %vm983 = vcmp.ge.f32.partialorder %v975, 0.5
  %vm984 = vcmp.ge.f32.partialorder %v976, 0.5
  %vm985 = vcmp.ge.f32.partialorder %v977, 0.5
  %v986 = vsel %vm978, 1, 0
  %v987 = vsel %vm979, 1, 0
  %v988 = vsel %vm980, 1, 0
  %v989 = vsel %vm981, 1, 0
  %v990 = vsel %vm982, 1, 0
  %v991 = vsel %vm983, 1, 0
  %v992 = vsel %vm984, 1, 0
  %v993 = vsel %vm985, 1, 0
  %v994 = vcvt.s32.f32 %v986
  %v995 = vcvt.s32.f32 %v987
  %v996 = vcvt.s32.f32 %v988
  %v997 = vcvt.s32.f32 %v989
  %v998 = vcvt.s32.f32 %v990
  %v999 = vcvt.s32.f32 %v991
  %v1000 = vcvt.s32.f32 %v992
  %v1001 = vcvt.s32.f32 %v993
  %v1002 = vpack.c.bf16 %v995, %v994
  %v1003 = vpack.c.bf16 %v997, %v996
  %v1004 = vpack.c.bf16 %v999, %v998
  %v1005 = vpack.c.bf16 %v1001, %v1000
  %1006 = vst [vmem:[#allocation4 + $0x60] sm:$0xff] %v1002
  %1007 = vst [vmem:[#allocation4 + $0x68] sm:$0xff] %v1003
  %1008 = vst [vmem:[#allocation4 + $0x70] sm:$0xff] %v1004
  %1009 = vst [vmem:[#allocation4 + $0x78] sm:$0xff] %v1005
  %v1010 = vld [vmem:[#allocation4] sm:$0xff]
  %v1011 = vld [vmem:[#allocation4 + $0x8] sm:$0xff]
  %v1012 = vld [vmem:[#allocation4 + $0x10] sm:$0xff]
  %v1013 = vld [vmem:[#allocation4 + $0x18] sm:$0xff]
  %v1014 = vld [vmem:[#allocation4 + $0x20] sm:$0xff]
  %v1015 = vld [vmem:[#allocation4 + $0x28] sm:$0xff]
  %v1016 = vld [vmem:[#allocation4 + $0x30] sm:$0xff]
  %v1017 = vld [vmem:[#allocation4 + $0x38] sm:$0xff]
  %v1018 = vld [vmem:[#allocation4 + $0x40] sm:$0xff]
  %v1019 = vld [vmem:[#allocation4 + $0x48] sm:$0xff]
  %v1020 = vld [vmem:[#allocation4 + $0x50] sm:$0xff]
  %v1021 = vld [vmem:[#allocation4 + $0x58] sm:$0xff]
  %v1022 = vld [vmem:[#allocation4 + $0x60] sm:$0xff]
  %v1023 = vld [vmem:[#allocation4 + $0x68] sm:$0xff]
  %v1024 = vld [vmem:[#allocation4 + $0x70] sm:$0xff]
  %v1025 = vld [vmem:[#allocation4 + $0x78] sm:$0xff]
  %v1026 = vld [vmem:[%s6] sm:$0xf]
  %v1027 = vld [vmem:[%s6 + $0x4] sm:$0xf]
  %v1028 = vld [vmem:[%s6 + $0x8] sm:$0xf]
  %v1029 = vld [vmem:[%s6 + $0xc] sm:$0xf]
  %v1030 = vld [vmem:[%s6 + $0x10] sm:$0xf]
  %v1031 = vld [vmem:[%s6 + $0x14] sm:$0xf]
  %v1032 = vld [vmem:[%s6 + $0x18] sm:$0xf]
  %v1033 = vld [vmem:[%s6 + $0x1c] sm:$0xf]
  %v1034 = vld [vmem:[%s6 + $0x20] sm:$0xf]
  %v1035 = vld [vmem:[%s6 + $0x24] sm:$0xf]
  %v1036 = vld [vmem:[%s6 + $0x28] sm:$0xf]
  %v1037 = vld [vmem:[%s6 + $0x2c] sm:$0xf]
  %v1038 = vld [vmem:[%s6 + $0x30] sm:$0xf]
  %v1039 = vld [vmem:[%s6 + $0x34] sm:$0xf]
  %v1040 = vld [vmem:[%s6 + $0x38] sm:$0xf]
  %v1041 = vld [vmem:[%s6 + $0x3c] sm:$0xf]
  %v1042 = vld [vmem:[%s6 + $0x40] sm:$0xf]
  %v1043 = vld [vmem:[%s6 + $0x44] sm:$0xf]
  %v1044 = vld [vmem:[%s6 + $0x48] sm:$0xf]
  %v1045 = vld [vmem:[%s6 + $0x4c] sm:$0xf]
  %v1046 = vld [vmem:[%s6 + $0x50] sm:$0xf]
  %v1047 = vld [vmem:[%s6 + $0x54] sm:$0xf]
  %v1048 = vld [vmem:[%s6 + $0x58] sm:$0xf]
  %v1049 = vld [vmem:[%s6 + $0x5c] sm:$0xf]
  %v1050 = vld [vmem:[%s6 + $0x60] sm:$0xf]
  %v1051 = vld [vmem:[%s6 + $0x64] sm:$0xf]
  %v1052 = vld [vmem:[%s6 + $0x68] sm:$0xf]
  %v1053 = vld [vmem:[%s6 + $0x6c] sm:$0xf]
  %v1054 = vld [vmem:[%s6 + $0x70] sm:$0xf]
  %v1055 = vld [vmem:[%s6 + $0x74] sm:$0xf]
  %v1056 = vld [vmem:[%s6 + $0x78] sm:$0xf]
  %v1057 = vld [vmem:[%s6 + $0x7c] sm:$0xf]
  %v1058 = vld [vmem:[%s6 + $0x80] sm:$0xf]
  %v1059 = vld [vmem:[%s6 + $0x84] sm:$0xf]
  %v1060 = vld [vmem:[%s6 + $0x88] sm:$0xf]
  %v1061 = vld [vmem:[%s6 + $0x8c] sm:$0xf]
  %v1062 = vld [vmem:[%s6 + $0x90] sm:$0xf]
  %v1063 = vld [vmem:[%s6 + $0x94] sm:$0xf]
  %v1064 = vld [vmem:[%s6 + $0x98] sm:$0xf]
  %v1065 = vld [vmem:[%s6 + $0x9c] sm:$0xf]
  %v1066 = vld [vmem:[%s6 + $0xa0] sm:$0xf]
  %v1067 = vld [vmem:[%s6 + $0xa4] sm:$0xf]
  %v1068 = vld [vmem:[%s6 + $0xa8] sm:$0xf]
  %v1069 = vld [vmem:[%s6 + $0xac] sm:$0xf]
  %v1070 = vld [vmem:[%s6 + $0xb0] sm:$0xf]
  %v1071 = vld [vmem:[%s6 + $0xb4] sm:$0xf]
  %v1072 = vld [vmem:[%s6 + $0xb8] sm:$0xf]
  %v1073 = vld [vmem:[%s6 + $0xbc] sm:$0xf]
  %v1074 = vld [vmem:[%s6 + $0xc0] sm:$0xf]
  %v1075 = vld [vmem:[%s6 + $0xc4] sm:$0xf]
  %v1076 = vld [vmem:[%s6 + $0xc8] sm:$0xf]
  %v1077 = vld [vmem:[%s6 + $0xcc] sm:$0xf]
  %v1078 = vld [vmem:[%s6 + $0xd0] sm:$0xf]
  %v1079 = vld [vmem:[%s6 + $0xd4] sm:$0xf]
  %v1080 = vld [vmem:[%s6 + $0xd8] sm:$0xf]
  %v1081 = vld [vmem:[%s6 + $0xdc] sm:$0xf]
  %v1082 = vld [vmem:[%s6 + $0xe0] sm:$0xf]
  %v1083 = vld [vmem:[%s6 + $0xe4] sm:$0xf]
  %v1084 = vld [vmem:[%s6 + $0xe8] sm:$0xf]
  %v1085 = vld [vmem:[%s6 + $0xec] sm:$0xf]
  %v1086 = vld [vmem:[%s6 + $0xf0] sm:$0xf]
  %v1087 = vld [vmem:[%s6 + $0xf4] sm:$0xf]
  %v1088 = vld [vmem:[%s6 + $0xf8] sm:$0xf]
  %v1089 = vld [vmem:[%s6 + $0xfc] sm:$0xf]
  %v1090 = vld [vmem:[%s7] sm:$0x1]
  %v1092 = vperm.slane %v1090, 0
  %v1110 = vunpack.c.l.b16 %v1010
  %v1111 = vunpack.c.h.b16 %v1010
  %v1112 = vunpack.c.l.b16 %v1011
  %v1113 = vunpack.c.h.b16 %v1011
  %v1114 = vunpack.c.l.b16 %v1012
  %v1115 = vunpack.c.h.b16 %v1012
  %v1116 = vunpack.c.l.b16 %v1013
  %v1117 = vunpack.c.h.b16 %v1013
  %v1118 = vunpack.c.l.b16 %v1014
  %v1119 = vunpack.c.h.b16 %v1014
  %v1120 = vunpack.c.l.b16 %v1015
  %v1121 = vunpack.c.h.b16 %v1015
  %v1122 = vunpack.c.l.b16 %v1016
  %v1123 = vunpack.c.h.b16 %v1016
  %v1124 = vunpack.c.l.b16 %v1017
  %v1125 = vunpack.c.h.b16 %v1017
  %v1126 = vunpack.c.l.b16 %v1018
  %v1127 = vunpack.c.h.b16 %v1018
  %v1128 = vunpack.c.l.b16 %v1019
  %v1129 = vunpack.c.h.b16 %v1019
  %v1130 = vunpack.c.l.b16 %v1020
  %v1131 = vunpack.c.h.b16 %v1020
  %v1132 = vunpack.c.l.b16 %v1021
  %v1133 = vunpack.c.h.b16 %v1021
  %v1134 = vunpack.c.l.b16 %v1022
  %v1135 = vunpack.c.h.b16 %v1022
  %v1136 = vunpack.c.l.b16 %v1023
  %v1137 = vunpack.c.h.b16 %v1023
  %v1138 = vunpack.c.l.b16 %v1024
  %v1139 = vunpack.c.h.b16 %v1024
  %v1140 = vunpack.c.l.b16 %v1025
  %v1141 = vunpack.c.h.b16 %v1025
  %v1142 = vpack.c.b16 %v1114, %v1110
  %v1143 = vpack.c.b16 %v1115, %v1111
  %v1144 = vpack.c.b16 %v1116, %v1112
  %v1145 = vpack.c.b16 %v1117, %v1113
  %v1146 = vpack.c.b16 %v1122, %v1118
  %v1147 = vpack.c.b16 %v1123, %v1119
  %v1148 = vpack.c.b16 %v1124, %v1120
  %v1149 = vpack.c.b16 %v1125, %v1121
  %v1150 = vpack.c.b16 %v1130, %v1126
  %v1151 = vpack.c.b16 %v1131, %v1127
  %v1152 = vpack.c.b16 %v1132, %v1128
  %v1153 = vpack.c.b16 %v1133, %v1129
  %v1154 = vpack.c.b16 %v1138, %v1134
  %v1155 = vpack.c.b16 %v1139, %v1135
  %v1156 = vpack.c.b16 %v1140, %v1136
  %v1157 = vpack.c.b16 %v1141, %v1137
  %v1238 = vunpack.c.l.b16 %v1026
  %v1239 = vunpack.c.l.b16 %v1027
  %v1240 = vunpack.c.l.b16 %v1028
  %v1241 = vunpack.c.l.b16 %v1029
  %v1242 = vunpack.c.l.b16 %v1030
  %v1243 = vunpack.c.l.b16 %v1031
  %v1244 = vunpack.c.l.b16 %v1032
  %v1245 = vunpack.c.l.b16 %v1033
  %v1246 = vunpack.c.l.b16 %v1034
  %v1247 = vunpack.c.l.b16 %v1035
  %v1248 = vunpack.c.l.b16 %v1036
  %v1249 = vunpack.c.l.b16 %v1037
  %v1250 = vunpack.c.l.b16 %v1038
  %v1251 = vunpack.c.l.b16 %v1039
  %v1252 = vunpack.c.l.b16 %v1040
  %v1253 = vunpack.c.l.b16 %v1041
  %v1254 = vunpack.c.l.b16 %v1042
  %v1255 = vunpack.c.l.b16 %v1043
  %v1256 = vunpack.c.l.b16 %v1044
  %v1257 = vunpack.c.l.b16 %v1045
  %v1258 = vunpack.c.l.b16 %v1046
  %v1259 = vunpack.c.l.b16 %v1047
  %v1260 = vunpack.c.l.b16 %v1048
  %v1261 = vunpack.c.l.b16 %v1049
  %v1262 = vunpack.c.l.b16 %v1050
  %v1263 = vunpack.c.l.b16 %v1051
  %v1264 = vunpack.c.l.b16 %v1052
  %v1265 = vunpack.c.l.b16 %v1053
  %v1266 = vunpack.c.l.b16 %v1054
  %v1267 = vunpack.c.l.b16 %v1055
  %v1268 = vunpack.c.l.b16 %v1056
  %v1269 = vunpack.c.l.b16 %v1057
  %v1270 = vunpack.c.l.b16 %v1058
  %v1271 = vunpack.c.l.b16 %v1059
  %v1272 = vunpack.c.l.b16 %v1060
  %v1273 = vunpack.c.l.b16 %v1061
  %v1274 = vunpack.c.l.b16 %v1062
  %v1275 = vunpack.c.l.b16 %v1063
  %v1276 = vunpack.c.l.b16 %v1064
  %v1277 = vunpack.c.l.b16 %v1065
  %v1278 = vunpack.c.l.b16 %v1066
  %v1279 = vunpack.c.l.b16 %v1067
  %v1280 = vunpack.c.l.b16 %v1068
  %v1281 = vunpack.c.l.b16 %v1069
  %v1282 = vunpack.c.l.b16 %v1070
  %v1283 = vunpack.c.l.b16 %v1071
  %v1284 = vunpack.c.l.b16 %v1072
  %v1285 = vunpack.c.l.b16 %v1073
  %v1286 = vunpack.c.l.b16 %v1074
  %v1287 = vunpack.c.l.b16 %v1075
  %v1288 = vunpack.c.l.b16 %v1076
  %v1289 = vunpack.c.l.b16 %v1077
  %v1290 = vunpack.c.l.b16 %v1078
  %v1291 = vunpack.c.l.b16 %v1079
  %v1292 = vunpack.c.l.b16 %v1080
  %v1293 = vunpack.c.l.b16 %v1081
  %v1294 = vunpack.c.l.b16 %v1082
  %v1295 = vunpack.c.l.b16 %v1083
  %v1296 = vunpack.c.l.b16 %v1084
  %v1297 = vunpack.c.l.b16 %v1085
  %v1298 = vunpack.c.l.b16 %v1086
  %v1299 = vunpack.c.l.b16 %v1087
  %v1300 = vunpack.c.l.b16 %v1088
  %v1301 = vunpack.c.l.b16 %v1089
  %v1302 = vpack.c.b16 %v1239, %v1238
  %v1303 = vpack.c.b16 %v1241, %v1240
  %v1304 = vpack.c.b16 %v1243, %v1242
  %v1305 = vpack.c.b16 %v1245, %v1244
  %v1306 = vpack.c.b16 %v1247, %v1246
  %v1307 = vpack.c.b16 %v1249, %v1248
  %v1308 = vpack.c.b16 %v1251, %v1250
  %v1309 = vpack.c.b16 %v1253, %v1252
  %v1310 = vpack.c.b16 %v1255, %v1254
  %v1311 = vpack.c.b16 %v1257, %v1256
  %v1312 = vpack.c.b16 %v1259, %v1258
  %v1313 = vpack.c.b16 %v1261, %v1260
  %v1314 = vpack.c.b16 %v1263, %v1262
  %v1315 = vpack.c.b16 %v1265, %v1264
  %v1316 = vpack.c.b16 %v1267, %v1266
  %v1317 = vpack.c.b16 %v1269, %v1268
  %v1318 = vpack.c.b16 %v1271, %v1270
  %v1319 = vpack.c.b16 %v1273, %v1272
  %v1320 = vpack.c.b16 %v1275, %v1274
  %v1321 = vpack.c.b16 %v1277, %v1276
  %v1322 = vpack.c.b16 %v1279, %v1278
  %v1323 = vpack.c.b16 %v1281, %v1280
  %v1324 = vpack.c.b16 %v1283, %v1282
  %v1325 = vpack.c.b16 %v1285, %v1284
  %v1326 = vpack.c.b16 %v1287, %v1286
  %v1327 = vpack.c.b16 %v1289, %v1288
  %v1328 = vpack.c.b16 %v1291, %v1290
  %v1329 = vpack.c.b16 %v1293, %v1292
  %v1330 = vpack.c.b16 %v1295, %v1294
  %v1331 = vpack.c.b16 %v1297, %v1296
  %v1332 = vpack.c.b16 %v1299, %v1298
  %v1333 = vpack.c.b16 %v1301, %v1300
  %1366 = vmatpush.bf16.msra.mxu0 %v1309
  %1367 = vmatpush.bf16.msra.mxu0 %v1308
  %1368 = vmatpush.bf16.msra.mxu0 %v1307
  %1369 = vmatpush.bf16.msra.mxu0 %v1306
  %1370 = vmatpush.bf16.msra.mxu0 %v1305
  %1371 = vmatpush.bf16.msra.mxu0 %v1304
  %1372 = vmatpush.bf16.msra.mxu0 %v1303
  %1373 = vmatpush.bf16.msra.mxu0 %v1302
  %1374 = vmatmul.bf16.gmra.mxu0 %v1142
  %v1375 = vpop.f32.mrf.mxu0
  %v1376 = vadd.f32 %v1092, %v1375
  %v1377 = vpop.f32.mrf.mxu0
  %v1378 = vadd.f32 %v1092, %v1377
  %1379 = vmatmul.bf16.gmra.mxu0 %v1146
  %v1380 = vpop.f32.mrf.mxu0
  %v1381 = vadd.f32 %v1092, %v1380
  %v1382 = vpop.f32.mrf.mxu0
  %v1383 = vadd.f32 %v1092, %v1382
  %1384 = vmatmul.bf16.gmra.mxu0 %v1150
  %v1385 = vpop.f32.mrf.mxu0
  %v1386 = vadd.f32 %v1092, %v1385
  %v1387 = vpop.f32.mrf.mxu0
  %v1388 = vadd.f32 %v1092, %v1387
  %1389 = vmatmul.bf16.gmra.mxu0 %v1154
  %v1390 = vpop.f32.mrf.mxu0
  %v1391 = vadd.f32 %v1092, %v1390
  %v1392 = vpop.f32.mrf.mxu0
  %v1393 = vadd.f32 %v1092, %v1392
  %1394 = vdwg.mxu0
  %1395 = vmatpush.bf16.msra.mxu0 %v1317
  %1396 = vmatpush.bf16.msra.mxu0 %v1316
  %1397 = vmatpush.bf16.msra.mxu0 %v1315
  %1398 = vmatpush.bf16.msra.mxu0 %v1314
  %1399 = vmatpush.bf16.msra.mxu0 %v1313
  %1400 = vmatpush.bf16.msra.mxu0 %v1312
  %1401 = vmatpush.bf16.msra.mxu0 %v1311
  %1402 = vmatpush.bf16.msra.mxu0 %v1310
  %1403 = vmatmul.bf16.gmra.mxu0 %v1143
  %v1404 = vpop.f32.mrf.mxu0
  %v1405 = vadd.f32 %v1376, %v1404
  %v1406 = vpop.f32.mrf.mxu0
  %v1407 = vadd.f32 %v1378, %v1406
  %1408 = vmatmul.bf16.gmra.mxu0 %v1147
  %v1409 = vpop.f32.mrf.mxu0
  %v1410 = vadd.f32 %v1381, %v1409
  %v1411 = vpop.f32.mrf.mxu0
  %v1412 = vadd.f32 %v1383, %v1411
  %1413 = vmatmul.bf16.gmra.mxu0 %v1151
  %v1414 = vpop.f32.mrf.mxu0
  %v1415 = vadd.f32 %v1386, %v1414
  %v1416 = vpop.f32.mrf.mxu0
  %v1417 = vadd.f32 %v1388, %v1416
  %1418 = vmatmul.bf16.gmra.mxu0 %v1155
  %v1419 = vpop.f32.mrf.mxu0
  %v1420 = vadd.f32 %v1391, %v1419
  %v1421 = vpop.f32.mrf.mxu0
  %v1422 = vadd.f32 %v1393, %v1421
  %1423 = vdwg.mxu0
  %1424 = vmatpush.bf16.msra.mxu0 %v1325
  %1425 = vmatpush.bf16.msra.mxu0 %v1324
  %1426 = vmatpush.bf16.msra.mxu0 %v1323
  %1427 = vmatpush.bf16.msra.mxu0 %v1322
  %1428 = vmatpush.bf16.msra.mxu0 %v1321
  %1429 = vmatpush.bf16.msra.mxu0 %v1320
  %1430 = vmatpush.bf16.msra.mxu0 %v1319
  %1431 = vmatpush.bf16.msra.mxu0 %v1318
  %1432 = vmatmul.bf16.gmra.mxu0 %v1144
  %v1433 = vpop.f32.mrf.mxu0
  %v1434 = vadd.f32 %v1405, %v1433
  %v1435 = vpop.f32.mrf.mxu0
  %v1436 = vadd.f32 %v1407, %v1435
  %1437 = vmatmul.bf16.gmra.mxu0 %v1148
  %v1438 = vpop.f32.mrf.mxu0
  %v1439 = vadd.f32 %v1410, %v1438
  %v1440 = vpop.f32.mrf.mxu0
  %v1441 = vadd.f32 %v1412, %v1440
  %1442 = vmatmul.bf16.gmra.mxu0 %v1152
  %v1443 = vpop.f32.mrf.mxu0
  %v1444 = vadd.f32 %v1415, %v1443
  %v1445 = vpop.f32.mrf.mxu0
  %v1446 = vadd.f32 %v1417, %v1445
  %1447 = vmatmul.bf16.gmra.mxu0 %v1156
  %v1448 = vpop.f32.mrf.mxu0
  %v1449 = vadd.f32 %v1420, %v1448
  %v1450 = vpop.f32.mrf.mxu0
  %v1451 = vadd.f32 %v1422, %v1450
  %1452 = vdwg.mxu0
  %1453 = vmatpush.bf16.msra.mxu0 %v1333
  %1454 = vmatpush.bf16.msra.mxu0 %v1332
  %1455 = vmatpush.bf16.msra.mxu0 %v1331
  %1456 = vmatpush.bf16.msra.mxu0 %v1330
  %1457 = vmatpush.bf16.msra.mxu0 %v1329
  %1458 = vmatpush.bf16.msra.mxu0 %v1328
  %1459 = vmatpush.bf16.msra.mxu0 %v1327
  %1460 = vmatpush.bf16.msra.mxu0 %v1326
  %1461 = vmatmul.bf16.gmra.mxu0 %v1145
  %v1462 = vpop.f32.mrf.mxu0
  %v1463 = vadd.f32 %v1434, %v1462
  %v1464 = vpop.f32.mrf.mxu0
  %v1465 = vadd.f32 %v1436, %v1464
  %1466 = vmatmul.bf16.gmra.mxu0 %v1149
  %v1467 = vpop.f32.mrf.mxu0
  %v1468 = vadd.f32 %v1439, %v1467
  %v1469 = vpop.f32.mrf.mxu0
  %v1470 = vadd.f32 %v1441, %v1469
  %1471 = vmatmul.bf16.gmra.mxu0 %v1153
  %v1472 = vpop.f32.mrf.mxu0
  %v1473 = vadd.f32 %v1444, %v1472
  %v1474 = vpop.f32.mrf.mxu0
  %v1475 = vadd.f32 %v1446, %v1474
  %1476 = vmatmul.bf16.gmra.mxu0 %v1157
  %v1477 = vpop.f32.mrf.mxu0
  %v1478 = vadd.f32 %v1449, %v1477
  %v1479 = vpop.f32.mrf.mxu0
  %v1480 = vadd.f32 %v1451, %v1479
  %1481 = vdwg.mxu0
  %v1482 = vadd.f32 %v1463, 0.0
  %v1483 = vadd.f32 %v1465, 0.0
  %vm1484 = vcmp.ge.f32.partialorder %v1482, 0.5
  %vm1485 = vcmp.ge.f32.partialorder %v1483, 0.5
  %v1486 = vsel %vm1484, 1, 0
  %v1487 = vsel %vm1485, 1, 0
  %v1488 = vcvt.s32.f32 %v1486
  %v1489 = vcvt.s32.f32 %v1487
  %v1490 = vadd.f32 %v1488, 0.0
  %v1491 = vadd.f32 %v1489, 0.0
  %v1492 = vsub.f32 1.0, %v1488
  %v1493 = vsub.f32 1.0, %v1489
  %v1494 = vmul.f32 %v1482, %v1492
  %v1495 = vmul.f32 %v1483, %v1493
  %v1496 = vmul.f32 %v1494, 0.5
  %v1497 = vmul.f32 %v1495, 0.5
  %v1498 = vadd.f32 %v1496, %v1468
  %v1499 = vadd.f32 %v1497, %v1470
  %vm1500 = vcmp.ge.f32.partialorder %v1498, 0.5
  %vm1501 = vcmp.ge.f32.partialorder %v1499, 0.5
  %v1502 = vsel %vm1500, 1, 0
  %v1503 = vsel %vm1501, 1, 0
  %v1504 = vcvt.s32.f32 %v1502
  %v1505 = vcvt.s32.f32 %v1503
  %v1506 = vadd.f32 %v1490, %v1504
  %v1507 = vadd.f32 %v1491, %v1505
  %v1508 = vsub.f32 1.0, %v1504
  %v1509 = vsub.f32 1.0, %v1505
  %v1510 = vmul.f32 %v1498, %v1508
  %v1511 = vmul.f32 %v1499, %v1509
  %v1512 = vmul.f32 %v1510, 0.5
  %v1513 = vmul.f32 %v1511, 0.5
  %v1514 = vadd.f32 %v1512, %v1473
  %v1515 = vadd.f32 %v1513, %v1475
  %vm1516 = vcmp.ge.f32.partialorder %v1514, 0.5
  %vm1517 = vcmp.ge.f32.partialorder %v1515, 0.5
  %v1518 = vsel %vm1516, 1, 0
  %v1519 = vsel %vm1517, 1, 0
  %v1520 = vcvt.s32.f32 %v1518
  %v1521 = vcvt.s32.f32 %v1519
  %v1522 = vadd.f32 %v1506, %v1520
  %v1523 = vadd.f32 %v1507, %v1521
  %v1524 = vsub.f32 1.0, %v1520
  %v1525 = vsub.f32 1.0, %v1521
  %v1526 = vmul.f32 %v1514, %v1524
  %v1527 = vmul.f32 %v1515, %v1525
  %v1528 = vmul.f32 %v1526, 0.5
  %v1529 = vmul.f32 %v1527, 0.5
  %v1530 = vadd.f32 %v1528, %v1478
  %v1531 = vadd.f32 %v1529, %v1480
  %vm1532 = vcmp.ge.f32.partialorder %v1530, 0.5
  %vm1533 = vcmp.ge.f32.partialorder %v1531, 0.5
  %v1534 = vsel %vm1532, 1, 0
  %v1535 = vsel %vm1533, 1, 0
  %v1536 = vcvt.s32.f32 %v1534
  %v1537 = vcvt.s32.f32 %v1535
  %v1538 = vadd.f32 %v1522, %v1536
  %v1539 = vadd.f32 %v1523, %v1537
  %v1540 = vpack.c.bf16 %v1539, %v1538
  %v1541 = vld [vmem:[%s8] sm:$0xf]
  %v1542 = vld [vmem:[%s8 + $0x4] sm:$0xf]
  %v1543 = vld [vmem:[%s8 + $0x8] sm:$0xf]
  %v1544 = vld [vmem:[%s8 + $0xc] sm:$0xf]
  %v1549 = vunpack.c.l.b16 %v1541
  %v1550 = vunpack.c.l.b16 %v1542
  %v1551 = vunpack.c.l.b16 %v1543
  %v1552 = vunpack.c.l.b16 %v1544
  %v1553 = vpack.c.b16 %v1550, %v1549
  %v1554 = vpack.c.b16 %v1552, %v1551
  %v1558 = vsel %vm285, %v1540, 0
  %1560 = vmatpush.bf16.msra.mxu0 0
  %1561 = vmatpush.bf16.msra.mxu0 0
  %1562 = vmatpush.bf16.msra.mxu0 0
  %1563 = vmatpush.bf16.msra.mxu0 0
  %1564 = vmatpush.bf16.msra.mxu0 0
  %1565 = vmatpush.bf16.msra.mxu0 0
  %1566 = vmatpush.bf16.msra.mxu0 %v1554
  %1567 = vmatpush.bf16.msra.mxu0 %v1553
  %1568 = vmatmul.bf16.gmra.mxu0 %v1558
  %v1569 = vpop.f32.mrf.mxu0
  %v1570 = vadd.f32 0.0, %v1569
  %v1571 = vpop.f32.mrf.mxu0
  %v1572 = vadd.f32 0.0, %v1571
  %1573 = vdwg.mxu0
  %v1574 = vmul.f32 %v1570, 0.25
  %v1575 = vmul.f32 %v1572, 0.25
  %v1576 = vld [vmem:[%s9] sm:$0x1]
  %v1578 = vperm.slane %v1576, 0
  %v1580 = vadd.f32 %v1574, %v1578
  %v1581 = vadd.f32 %v1575, %v1578
  %vm1582 = vcmask 31744
  %1583 = vst.msk [vmem:[%s10] sm:$0xff] %vm1582, %v1580
  %1584 = vst.msk [vmem:[%s10 + $0x8] sm:$0xff] %vm1582, %v1581
  // Predicated region
  $region42: #{spike_full_quantile_forward.1} parent=0 // pred_check
    _
  $region43: #{spike_full_quantile_forward.1} parent=0 // pred_check_branch
    %1586 = sbr.rel (0) target = $region45
  $region44: #{spike_full_quantile_forward.1} parent=0 // pred_region
    _
  $region45: #{spike_full_quantile_forward.1} parent=0 // pred_fallthru
    _
  // Predicated region
  $region46: #{spike_full_quantile_forward.1} parent=0 // pred_check
    _
  $region47: #{spike_full_quantile_forward.1} parent=0 // pred_check_branch
    %1588 = sbr.rel (0) target = $region49
  $region48: #{spike_full_quantile_forward.1} parent=0 // pred_region
    _
  $region49: #{spike_full_quantile_forward.1} parent=0 // pred_fallthru
    _

</llo_original>
